<compile_context>
chip_gen: v5e
topology: v5e:2x2
jax: 0.10.0
libtpu: 0.0.40
codegen_flags: <defaults>
</compile_context>

<pallas_src>
import math

import jax
import jax.numpy as jnp
from jax.experimental import pallas as pl
from jax.experimental.pallas import tpu as pltpu

_LANES = 128


# --------------------------------------------------------------------------------------
# Kernel body: fused Linear -> ReLU -> Linear on one batch tile.
# bf16 MXU operands, f32 accumulation, f32 bias add / ReLU / store.
# --------------------------------------------------------------------------------------
def _mlp_seq_kernel(x_ref, w1_ref, b1_ref, w2_ref, b2_ref, o_ref):
    x = x_ref[...].astype(w1_ref.dtype)                       # f32 -> bf16 for the MXU
    h = jnp.dot(x, w1_ref[...], preferred_element_type=jnp.float32) + b1_ref[...]
    h = jnp.maximum(h, 0.0)                                    # ReLU on the VPU (f32)
    y = jnp.dot(h.astype(w2_ref.dtype), w2_ref[...],
                preferred_element_type=jnp.float32) + b2_ref[...]
    o_ref[...] = y.astype(o_ref.dtype)


# --------------------------------------------------------------------------------------
# Lane-dense packing helpers (pure layout transforms, identical math up to bf16 weights).
# --------------------------------------------------------------------------------------
def _pack_factor(d_in, d_out):
    """Smallest power-of-two P such that P*d_in and P*d_out are multiples of 128."""
    p = 1
    while p <= _LANES:
        if (p * d_in) % _LANES == 0 and (p * d_out) % _LANES == 0:
            return p
        p *= 2
    return 1


def pack_mlp_params(w1, b1, w2, b2, pack, weight_dtype=jnp.bfloat16):
    """Expand weights to block-diagonal form so P packed rows go through one matmul.

    Weights are stored in bf16 (MXU operands); biases stay f32 (added post-accumulate).
    """
    if pack == 1:
        return (w1.astype(weight_dtype), b1.astype(jnp.float32),
                w2.astype(weight_dtype), b2.astype(jnp.float32))
    eye = jnp.eye(pack, dtype=w1.dtype)
    w1p = jnp.kron(eye, w1).astype(weight_dtype)   # (P*D_in,  P*D_hid), block diagonal
    w2p = jnp.kron(eye, w2).astype(weight_dtype)   # (P*D_hid, P*D_out), block diagonal
    b1p = jnp.tile(b1, (1, pack)).astype(jnp.float32)   # (1, P*D_hid)
    b2p = jnp.tile(b2, (1, pack)).astype(jnp.float32)   # (1, P*D_out)
    return w1p, b1p, w2p, b2p


def _pick_tile_rows(n_rows, requested=None, max_tile=4096):
    """Pick the packed-row batch tile.

    Preference order:
      * explicit legal request;
      * grid=(2,) -- one tile per v7x TensorCore (also only 1-2 steps on v5e/v6e);
      * a single full-extent tile (grid=(1,));
      * otherwise the largest multiple-of-8 divisor <= max_tile (huge batches).
    """
    def legal(t):
        return 0 < t <= n_rows and n_rows % t == 0 and (t % 8 == 0 or t == n_rows)

    if requested is not None and legal(min(requested, n_rows)):
        return min(requested, n_rows)
    half = n_rows // 2
    if n_rows % 2 == 0 and legal(half) and half <= max_tile:
        return half
    if n_rows <= max_tile:
        return n_rows
    best = n_rows
    for d in range(8, max_tile + 1, 8):
        if n_rows % d == 0:
            best = d
    return best


def _pad_rows(x, multiple):
    """Zero-pad the batch dim up to a multiple of `multiple`; returns (padded, orig_B)."""
    b = x.shape[0]
    rem = b % multiple
    if rem == 0:
        return x, b
    pad = multiple - rem
    return jnp.pad(x, ((0, pad), (0, 0))), b


# --------------------------------------------------------------------------------------
# pallas_call wrapper.
# --------------------------------------------------------------------------------------
def _packed_mlp_forward(x, w1p, b1p, w2p, b2p, pack, d_out, *, tile_rows=None):
    B, d_in = x.shape
    assert B % pack == 0, "batch must be divisible by the row-pack factor"
    bp = B // pack                           # packed (lane-dense) row count
    di = pack * d_in                         # packed input width   (multiple of 128)
    dh = w1p.shape[1]                        # packed hidden width
    do = pack * d_out                        # packed output width  (multiple of 128)

    xp = x.reshape(bp, di)                   # row-major relabel: zero data movement

    tile_r = _pick_tile_rows(bp, tile_rows)
    grid = (bp // tile_r,)

    io_itemsize = jnp.dtype(x.dtype).itemsize
    w_itemsize = jnp.dtype(w1p.dtype).itemsize

    # Real (padded, block-diagonal) MXU work — don't under-report to the scheduler.
    flops = 2 * bp * (di * dh + dh * do)
    bytes_accessed = ((xp.size + bp * do) * io_itemsize
                      + (w1p.size + w2p.size) * w_itemsize
                      + (b1p.size + b2p.size) * 4)

    # Tight VMEM budget (~1.5x estimate): double-buffered x/out tiles, resident
    # bf16 block-diag weights (also double-buffered by BlockSpec), f32 temps.
    vmem_est = (2 * tile_r * (di + do) * io_itemsize
                + 2 * ((w1p.size + w2p.size) * w_itemsize + (b1p.size + b2p.size) * 4)
                + tile_r * (dh + do) * 4)
    vmem_limit = int(min(max(int(1.5 * vmem_est), 1 << 20), 32 << 20))

    out_p = pl.pallas_call(
        _mlp_seq_kernel,
        out_shape=jax.ShapeDtypeStruct((bp, do), x.dtype),
        grid_spec=pl.GridSpec(
            grid=grid,
            in_specs=[
                pl.BlockSpec((tile_r, di), lambda i: (i, 0)),   # x tile (streamed)
                # Weights/biases: constant index_map -> resident across the grid.
                pl.BlockSpec((di, dh), lambda i: (0, 0)),       # W1 (block-diag, bf16)
                pl.BlockSpec((1, dh),  lambda i: (0, 0)),       # b1 (f32)
                pl.BlockSpec((dh, do), lambda i: (0, 0)),       # W2 (block-diag, bf16)
                pl.BlockSpec((1, do),  lambda i: (0, 0)),       # b2 (f32)
            ],
            out_specs=pl.BlockSpec((tile_r, do), lambda i: (i, 0)),
        ),
        compiler_params=pltpu.CompilerParams(
            dimension_semantics=("parallel",),                  # megacore on v7x
            vmem_limit_bytes=vmem_limit),
        cost_estimate=pl.CostEstimate(
            flops=flops, transcendentals=0, bytes_accessed=bytes_accessed),
    )(xp, w1p, b1p, w2p, b2p)

    return out_p.reshape(B, d_out)


def sequential_mlp_forward(x, w1, b1, w2, b2, *, tile_rows=None):
    """Fused forward of nn.Sequential(Linear, ReLU, Linear) as one pallas_call."""
    d_in, _ = w1.shape
    d_out = w2.shape[1]
    pack = _pack_factor(d_in, d_out)
    packed = pack_mlp_params(w1, b1, w2, b2, pack)
    xp, orig_b = _pad_rows(x, pack)          # never take a lane-sparse pack=1 path
    out = _packed_mlp_forward(xp, *packed, pack, d_out, tile_rows=tile_rows)
    return out[:orig_b]


# --------------------------------------------------------------------------------------
# JAX port of the PyTorch wrapper.  Forward semantics: out = net(*inputs).
# --------------------------------------------------------------------------------------
class MdWrpWithSelfBkwd:

    def __init__(self, params, md_device=None, mp_order=0,
                 is_last_part=False, do_acts_ckpt=True, tile_rows=None):
        w1, b1, w2, b2 = params
        self.params = params
        self.md_device = md_device
        self.mp_order = mp_order
        self.is_last_part = is_last_part
        self.do_acts_ckpt = do_acts_ckpt
        self.tile_rows = tile_rows
        self.inp_cache = None
        self.out_cache = None
        self.d_in, self.d_hid = w1.shape
        self.d_out = w2.shape[1]
        # Pre-pack weights once into the lane-dense block-diagonal bf16 layout.
        self._pack = _pack_factor(self.d_in, self.d_out)
        self._packed = pack_mlp_params(w1, b1, w2, b2, self._pack)

    def cache_graded_input(self, *args):
        # In JAX there is no in-place requires_grad flag; caching the values is the
        # forward-equivalent behavior of detach()+requires_grad for mp_order > 0.
        self.inp_cache = list(args)
        return self.inp_cache

    def forward(self, *args):
        inputs = self.cache_graded_input(*args)
        # torch.enable_grad()/no_grad() only affect autograd taping, not values.
        # TODO(synk): mp_backward/get_input_grads (manual autograd.backward on cached
        # activations) has no forward-value effect; use jax.vjp externally if needed.
        x = inputs[0]
        xp, orig_b = _pad_rows(x, self._pack)
        out = _packed_mlp_forward(xp, *self._packed, self._pack, self.d_out,
                                  tile_rows=self.tile_rows)
        out = out[:orig_b]
        self.out_cache = out
        return out

    def __call__(self, *args):
        return self.forward(*args)


# --------------------------------------------------------------------------------------
# Reference / init helpers.
# --------------------------------------------------------------------------------------
def init_linear_params(key, d_in, d_out, dtype=jnp.float32):
    """PyTorch nn.Linear default init: U(-1/sqrt(fan_in), 1/sqrt(fan_in))."""
    kw, kb = jax.random.split(key)
    bound = 1.0 / math.sqrt(d_in)
    w = jax.random.uniform(kw, (d_in, d_out), dtype, minval=-bound, maxval=bound)
    b = jax.random.uniform(kb, (1, d_out), dtype, minval=-bound, maxval=bound)
    return w, b


def reference_forward(x, w1, b1, w2, b2):
    h = jnp.maximum(x @ w1 + b1, 0.0)
    return h @ w2 + b2


if __name__ == "__main__":
    B, D_IN, D_HID, D_OUT = 4096, 32, 64, 32

    key = jax.random.PRNGKey(0)
    kx, k1, k2 = jax.random.split(key, 3)

    x = jax.random.normal(kx, (B, D_IN), jnp.float32)
    w1, b1 = init_linear_params(k1, D_IN, D_HID)
    w2, b2 = init_linear_params(k2, D_HID, D_OUT)

    # tile_rows is left to the auto-picker: at B=4096 (pack=4 -> 1024 packed rows)
    # it chooses 512 packed rows -> grid=(2,): one full tile per v7x TensorCore,
    # and only 1-2 pipeline steps on v5e/v6e (per-step overhead dominated before).
    wrapper = MdWrpWithSelfBkwd(params=(w1, b1, w2, b2),
                                mp_order=1, is_last_part=False, do_acts_ckpt=True)

    out = jax.block_until_ready(wrapper(x))
    ref = reference_forward(x, w1, b1, w2, b2)
    assert out.shape == (B, D_OUT)
    # bf16 MXU operands (f32 accumulation): tolerance loosened vs. pure-f32 path.
    assert jnp.allclose(out, ref, atol=2e-2, rtol=2e-2), "Pallas kernel mismatch vs reference"

    # Secondary small-shape test: batch not divisible by the pack factor exercises
    # the zero-pad + slice path (no lane-sparse fallback).
    x_small = jax.random.normal(kx, (30, D_IN), jnp.float32)
    out_small = jax.block_until_ready(
        sequential_mlp_forward(x_small, w1, b1, w2, b2))
    ref_small = reference_forward(x_small, w1, b1, w2, b2)
    assert out_small.shape == (30, D_OUT)
    assert jnp.allclose(out_small, ref_small, atol=2e-2, rtol=2e-2), \
        "Pallas kernel mismatch vs reference (padded batch)"

    print("KERNEL_OK")
</pallas_src>

<mosaic_0001>
module attributes {stable_mosaic.version = 11 : i64} {
  func.func @_mlp_seq_kernel(%arg0: i32, %arg1: memref<512x128xf32, #tpu.memory_space<vmem>>, %arg2: memref<128x256xbf16, #tpu.memory_space<vmem>>, %arg3: memref<1x256xf32, #tpu.memory_space<vmem>>, %arg4: memref<256x128xbf16, #tpu.memory_space<vmem>>, %arg5: memref<1x128xf32, #tpu.memory_space<vmem>>, %arg6: memref<512x128xf32, #tpu.memory_space<vmem>>) attributes {dimension_semantics = [#tpu.dimension_semantics<parallel>], iteration_bounds = array<i64: 2>, scalar_prefetch = 0 : i64, scratch_operands = 0 : i64, tpu.core_type = #tpu.core_type<tc>, window_params = [{transform_indices = @transform_0, window_bounds = array<i64: 512, 128>}, {pipeline_mode = #tpu.pipeline_mode<synchronous>, transform_indices = @transform_1, window_bounds = array<i64: 128, 256>}, {pipeline_mode = #tpu.pipeline_mode<synchronous>, transform_indices = @transform_2, window_bounds = array<i64: 1, 256>}, {pipeline_mode = #tpu.pipeline_mode<synchronous>, transform_indices = @transform_3, window_bounds = array<i64: 256, 128>}, {pipeline_mode = #tpu.pipeline_mode<synchronous>, transform_indices = @transform_4, window_bounds = array<i64: 1, 128>}, {transform_indices = @transform_5, window_bounds = array<i64: 512, 128>}]} {
    %c0 = arith.constant 0 : index
    %c0_0 = arith.constant 0 : index
    %0 = vector.load %arg1[%c0, %c0_0] : memref<512x128xf32, #tpu.memory_space<vmem>>, vector<512x128xf32>
    %1 = arith.truncf %0 : vector<512x128xf32> to vector<512x128xbf16>
    %c0_1 = arith.constant 0 : index
    %c0_2 = arith.constant 0 : index
    %2 = vector.load %arg2[%c0_1, %c0_2] : memref<128x256xbf16, #tpu.memory_space<vmem>>, vector<128x256xbf16>
    %cst = arith.constant dense<0.000000e+00> : vector<512x256xf32>
    %3 = tpu.matmul %1, %2, %cst {dimension_numbers = #tpu.dot_dimension_numbers<[1], [0], [0], [1], [0, 0, 1, 1], [], []>} : vector<512x128xbf16>, vector<128x256xbf16>, vector<512x256xf32> -> vector<512x256xf32>
    %c0_3 = arith.constant 0 : index
    %c0_4 = arith.constant 0 : index
    %4 = vector.load %arg3[%c0_3, %c0_4] : memref<1x256xf32, #tpu.memory_space<vmem>>, vector<1x256xf32>
    %5 = vector.broadcast %4 : vector<1x256xf32> to vector<512x256xf32>
    %6 = arith.addf %3, %5 : vector<512x256xf32>
    %cst_5 = arith.constant 0.000000e+00 : f32
    %7 = vector.broadcast %cst_5 : f32 to vector<512x256xf32>
    %8 = arith.maximumf %6, %7 : vector<512x256xf32>
    %9 = arith.truncf %8 : vector<512x256xf32> to vector<512x256xbf16>
    %c0_6 = arith.constant 0 : index
    %c0_7 = arith.constant 0 : index
    %10 = vector.load %arg4[%c0_6, %c0_7] : memref<256x128xbf16, #tpu.memory_space<vmem>>, vector<256x128xbf16>
    %cst_8 = arith.constant dense<0.000000e+00> : vector<512x128xf32>
    %11 = tpu.matmul %9, %10, %cst_8 {dimension_numbers = #tpu.dot_dimension_numbers<[1], [0], [0], [1], [0, 0, 1, 1], [], []>} : vector<512x256xbf16>, vector<256x128xbf16>, vector<512x128xf32> -> vector<512x128xf32>
    %c0_9 = arith.constant 0 : index
    %c0_10 = arith.constant 0 : index
    %12 = vector.load %arg5[%c0_9, %c0_10] : memref<1x128xf32, #tpu.memory_space<vmem>>, vector<1x128xf32>
    %13 = vector.broadcast %12 : vector<1x128xf32> to vector<512x128xf32>
    %14 = arith.addf %11, %13 : vector<512x128xf32>
    %c0_11 = arith.constant 0 : index
    %c0_12 = arith.constant 0 : index
    %15 = vector.load %arg6[%c0_11, %c0_12] : memref<512x128xf32, #tpu.memory_space<vmem>>, vector<512x128xf32>
    tpu.vector_store %arg6[%c0_11, %c0_12], %14 {strides = array<i32>} : memref<512x128xf32, #tpu.memory_space<vmem>>, vector<512x128xf32>,
    return
  }
  func.func @transform_0(%arg0: i32) -> (i32, i32) {
    %c0_i32 = arith.constant 0 : i32
    %c0_i32_0 = arith.constant 0 : i32
    return %arg0, %c0_i32 : i32, i32
  }
  func.func @transform_1(%arg0: i32) -> (i32, i32) {
    %c0_i32 = arith.constant 0 : i32
    %c0_i32_0 = arith.constant 0 : i32
    %c0_i32_1 = arith.constant 0 : i32
    return %c0_i32, %c0_i32_0 : i32, i32
  }
  func.func @transform_2(%arg0: i32) -> (i32, i32) {
    %c0_i32 = arith.constant 0 : i32
    %c0_i32_0 = arith.constant 0 : i32
    %c0_i32_1 = arith.constant 0 : i32
    return %c0_i32, %c0_i32_0 : i32, i32
  }
  func.func @transform_3(%arg0: i32) -> (i32, i32) {
    %c0_i32 = arith.constant 0 : i32
    %c0_i32_0 = arith.constant 0 : i32
    %c0_i32_1 = arith.constant 0 : i32
    return %c0_i32, %c0_i32_0 : i32, i32
  }
  func.func @transform_4(%arg0: i32) -> (i32, i32) {
    %c0_i32 = arith.constant 0 : i32
    %c0_i32_0 = arith.constant 0 : i32
    %c0_i32_1 = arith.constant 0 : i32
    return %c0_i32, %c0_i32_0 : i32, i32
  }
  func.func @transform_5(%arg0: i32) -> (i32, i32) {
    %c0_i32 = arith.constant 0 : i32
    %c0_i32_0 = arith.constant 0 : i32
    return %arg0, %c0_i32 : i32, i32
  }
}

</mosaic_0001>

<llo_original>
// kernel: tpu_custom_call.1
$region0: #{tpu_custom_call.1}
  #allocation0 [shape = 'u32[]', space=smem, size = 0x4, offset = 0x4, fixed_abs, tag = 'smem constant byte address 0x4 - core index']
  #allocation1 [shape = 'u32[72,128]{1,0:T(1,128)}', space=vmem, size = 0x9000, scoped, tag = 'internal scratch']
  %s0 = inlined_call_operand.hbm [shape: f32[1024,128], index: 0, kind: input, shape index: {}]
  %s1 = inlined_call_operand.hbm [shape: bf16[128,256], index: 1, kind: input, shape index: {}]
  %s2 = inlined_call_operand.hbm [shape: f32[1,256], index: 2, kind: input, shape index: {}]
  %s3 = inlined_call_operand.hbm [shape: bf16[256,128], index: 3, kind: input, shape index: {}]
  %s4 = inlined_call_operand.vmem [shape: f32[1,128], index: 4, kind: input, shape index: {}]
  %s5 = inlined_call_operand.hbm [shape: f32[1024,128], index: 5, kind: output, shape index: {}]
  %s6 = sld [smem:[#allocation0]]
  $region69: #{tpu_custom_call.1} parent=0
    _
  %s8 = ssub.s32 1, %s6
  %s9 = scalar_select 0, %s8, %s6
  $region1: #{tpu_custom_call.1} parent=0
    #allocation2 [shape = 'u8[524288]{0}', space=vmem, size = 0x80000, scoped, tag = 'input window, operand 0']
    #allocation3 [shape = 's32[2]{0}', space=sflag, size = 0x8, scoped, tag = 'scoped memory for tpu_custom_call.1']
    #allocation4 [shape = 's32[2]{0}', space=sflag, size = 0x8, scoped, tag = 'scoped memory for tpu_custom_call.1']
    #allocation5 [shape = 'u8[65536]{0}', space=vmem, size = 0x10000, scoped, tag = 'input window, operand 1, single buffered']
    #allocation6 [shape = 's32[1]{0}', space=sflag, size = 0x4, scoped, tag = 'scoped memory for tpu_custom_call.1']
    #allocation7 [shape = 'u8[1024]{0}', space=vmem, size = 0x400, scoped, tag = 'input window, operand 2, single buffered']
    #allocation8 [shape = 'u8[65536]{0}', space=vmem, size = 0x10000, scoped, tag = 'input window, operand 3, single buffered']
    #allocation9 [shape = 's32[1]{0}', space=sflag, size = 0x4, scoped, tag = 'scoped memory for tpu_custom_call.1']
    #allocation10 [shape = 'u8[524288]{0}', space=vmem, size = 0x80000, scoped, tag = 'output window, operand 0']
    %10 = vsyncpa [#allocation3], 0
    %s11 = scalar_lea.sflag [#allocation3], 1
    %12 = vsyncpa %s11, 0
    %13 = vsyncpa [#allocation6], 0
    %14 = vsyncpa [#allocation9], 0
    %15 = vsyncpa [#allocation4], 0
    %s16 = scalar_lea.sflag [#allocation4], 1
    %17 = vsyncpa %s16, 0
    loop: start=0, step=1, limit=4
    $region2: #{tpu_custom_call.1} parent=1 // loop_pre_header
      _
    $region3: #{tpu_custom_call.1} parent=1 // loop_header
      %s19 = sphi 0, %s23
      %p20 = scmp.ge.s32.totalorder %s19, 4
      %s29 = sphi 0, %s31
      %s32 = sphi 0, %s29
      %s33 = sphi 0, %s32
      %s49 = sphi 0, %s33
      %s53 = sphi 0, %s53
      %s55 = sphi 0, %s53
      %s56 = sphi 0, %s55
      %s70 = sphi 0, %s56
      %s74 = sphi 0, %s74
      %s76 = sphi 0, %s74
      %s77 = sphi 0, %s76
      %s91 = sphi 0, %s77
      %s95 = sphi 0, %s95
      %s97 = sphi 0, %s95
      %s98 = sphi 0, %s97
      %s112 = sphi 0, %s98
      %s116 = sphi 0, %s116
      %s118 = sphi 0, %s116
      %s119 = sphi 0, %s118
      %s133 = sphi 0, %s119
      %s139 = sphi 0, %s141
      %s142 = sphi 0, %s139
      %s143 = sphi 0, %s142
      %s159 = sphi 0, %s143
    $region4: #{tpu_custom_call.1} parent=1 // loop_header_branch
      %22 = sbr.rel (%p20) target = $region8
    $region5: #{tpu_custom_call.1} parent=1 // loop_body
      %s24 = ssub.s32 %s19, 1
      %s25 = ssub.s32 %s19, 2
      %s26 = sadd.s32 %s19, 1
      %s27 = ssub.s32 %s19, %s26
      %p28 = scmp.eq.s32.totalorder %s27, 0
      %s30 = sadd.s32 %s29, 1
      %s31 = scalar_select %p28, %s29, %s30
      %p34 = pneg %p28
      %p35 = scmp.eq.s32.totalorder %s19, 1
      %p36 = por %p34, %p35
      %p37 = scmp.ne.s32.totalorder %s29, %s32
      %p38 = scmp.eq.s32.totalorder %s19, 0
      %p39 = por %p37, %p38
      %p40 = scmp.ne.s32.totalorder %s29, %s32
      %p41 = scmp.eq.s32.totalorder %s24, 1
      %p42 = por %p40, %p41
      %p43 = scmp.ne.s32.totalorder %s32, %s33
      %p44 = scmp.eq.s32.totalorder %s24, 0
      %p45 = por %p43, %p44
      %p46 = scmp.ne.s32.totalorder %s32, %s33
      %p47 = scmp.eq.s32.totalorder %s25, 1
      %p48 = por %p46, %p47
      %p50 = scmp.ne.s32.totalorder %s33, %s49
      %p51 = scmp.eq.s32.totalorder %s25, 0
      %p52 = por %p50, %p51
      %s54 = sadd.s32 %s53, 1
      %p57 = scmp.eq.s32.totalorder %s19, 1
      %p58 = scmp.ne.s32.totalorder %s53, %s55
      %p59 = scmp.eq.s32.totalorder %s19, 0
      %p60 = por %p58, %p59
      %p61 = scmp.ne.s32.totalorder %s53, %s55
      %p62 = scmp.eq.s32.totalorder %s24, 1
      %p63 = por %p61, %p62
      %p64 = scmp.ne.s32.totalorder %s55, %s56
      %p65 = scmp.eq.s32.totalorder %s24, 0
      %p66 = por %p64, %p65
      %p67 = scmp.ne.s32.totalorder %s55, %s56
      %p68 = scmp.eq.s32.totalorder %s25, 1
      %p69 = por %p67, %p68
      %p71 = scmp.ne.s32.totalorder %s56, %s70
      %p72 = scmp.eq.s32.totalorder %s25, 0
      %p73 = por %p71, %p72
      %s75 = sadd.s32 %s74, 1
      %p78 = scmp.eq.s32.totalorder %s19, 1
      %p79 = scmp.ne.s32.totalorder %s74, %s76
      %p80 = scmp.eq.s32.totalorder %s19, 0
      %p81 = por %p79, %p80
      %p82 = scmp.ne.s32.totalorder %s74, %s76
      %p83 = scmp.eq.s32.totalorder %s24, 1
      %p84 = por %p82, %p83
      %p85 = scmp.ne.s32.totalorder %s76, %s77
      %p86 = scmp.eq.s32.totalorder %s24, 0
      %p87 = por %p85, %p86
      %p88 = scmp.ne.s32.totalorder %s76, %s77
      %p89 = scmp.eq.s32.totalorder %s25, 1
      %p90 = por %p88, %p89
      %p92 = scmp.ne.s32.totalorder %s77, %s91
      %p93 = scmp.eq.s32.totalorder %s25, 0
      %p94 = por %p92, %p93
      %s96 = sadd.s32 %s95, 1
      %p99 = scmp.eq.s32.totalorder %s19, 1
      %p100 = scmp.ne.s32.totalorder %s95, %s97
      %p101 = scmp.eq.s32.totalorder %s19, 0
      %p102 = por %p100, %p101
      %p103 = scmp.ne.s32.totalorder %s95, %s97
      %p104 = scmp.eq.s32.totalorder %s24, 1
      %p105 = por %p103, %p104
      %p106 = scmp.ne.s32.totalorder %s97, %s98
      %p107 = scmp.eq.s32.totalorder %s24, 0
      %p108 = por %p106, %p107
      %p109 = scmp.ne.s32.totalorder %s97, %s98
      %p110 = scmp.eq.s32.totalorder %s25, 1
      %p111 = por %p109, %p110
      %p113 = scmp.ne.s32.totalorder %s98, %s112
      %p114 = scmp.eq.s32.totalorder %s25, 0
      %p115 = por %p113, %p114
      %s117 = sadd.s32 %s116, 1
      %p120 = scmp.eq.s32.totalorder %s19, 1
      %p121 = scmp.ne.s32.totalorder %s116, %s118
      %p122 = scmp.eq.s32.totalorder %s19, 0
      %p123 = por %p121, %p122
      %p124 = scmp.ne.s32.totalorder %s116, %s118
      %p125 = scmp.eq.s32.totalorder %s24, 1
      %p126 = por %p124, %p125
      %p127 = scmp.ne.s32.totalorder %s118, %s119
      %p128 = scmp.eq.s32.totalorder %s24, 0
      %p129 = por %p127, %p128
      %p130 = scmp.ne.s32.totalorder %s118, %s119
      %p131 = scmp.eq.s32.totalorder %s25, 1
      %p132 = por %p130, %p131
      %p134 = scmp.ne.s32.totalorder %s119, %s133
      %p135 = scmp.eq.s32.totalorder %s25, 0
      %p136 = por %p134, %p135
      %s137 = ssub.s32 %s19, %s26
      %p138 = scmp.eq.s32.totalorder %s137, 0
      %s140 = sadd.s32 %s139, 1
      %s141 = scalar_select %p138, %s139, %s140
      %p144 = pneg %p138
      %p145 = scmp.eq.s32.totalorder %s19, 1
      %p146 = por %p144, %p145
      %p147 = scmp.ne.s32.totalorder %s139, %s142
      %p148 = scmp.eq.s32.totalorder %s19, 0
      %p149 = por %p147, %p148
      %p150 = scmp.ne.s32.totalorder %s139, %s142
      %p151 = scmp.eq.s32.totalorder %s24, 1
      %p152 = por %p150, %p151
      %p153 = scmp.ne.s32.totalorder %s142, %s143
      %p154 = scmp.eq.s32.totalorder %s24, 0
      %p155 = por %p153, %p154
      %p156 = scmp.ne.s32.totalorder %s142, %s143
      %p157 = scmp.eq.s32.totalorder %s25, 1
      %p158 = por %p156, %p157
      %p160 = scmp.ne.s32.totalorder %s143, %s159
      %p161 = scmp.eq.s32.totalorder %s25, 0
      %p162 = por %p160, %p161
      %p163 = scmp.le.s32.totalorder 1, %s19
      %p164 = scmp.lt.s32.totalorder %s19, 3
      %p165 = pnand %p163, %p164
      %p166 = pneg %p165
      // Predicated region
      $region9: #{tpu_custom_call.1} parent=5 // pred_check
        _
      $region10: #{tpu_custom_call.1} parent=5 // pred_check_branch
        %168 = sbr.rel (%p165) target = $region12
      $region11: #{tpu_custom_call.1} parent=5 // pred_region
        %s169 = ssub.s32 %s19, 1
        // Predicated region
        $region13: #{tpu_custom_call.1} parent=11 // pred_check
          %p170 = pneg %p66
        $region14: #{tpu_custom_call.1} parent=11 // pred_check_branch
          %172 = sbr.rel (%p170) target = $region16
        $region15: #{tpu_custom_call.1} parent=11 // pred_region
          %174 = vsyncadd [#allocation6], 0
          %s175 = sshll.u32 %s1, 4
          %s176 = int_to_ptr.hbm [resolvable:$true] %s175
          %s177 = sshll.u32 [#allocation5], 4
          %s178 = int_to_ptr.vmem [resolvable:$true] %s177
          %183 = dma.hbm_to_vmem [thread:$0]  %s176, 2048, %s178, [#allocation6], 128, 128, 8
        $region16: #{tpu_custom_call.1} parent=11 // pred_fallthru
          _
        // Predicated region
        $region17: #{tpu_custom_call.1} parent=11 // pred_check
          %p184 = pneg %p87
        $region18: #{tpu_custom_call.1} parent=11 // pred_check_branch
          %186 = sbr.rel (%p184) target = $region20
        $region19: #{tpu_custom_call.1} parent=11 // pred_region
          %188 = vsyncadd [#allocation6], 0
          %s190 = sshll.u32 %s2, 4
          %s191 = int_to_ptr.hbm [resolvable:$true] %s190
          %s192 = sshll.u32 [#allocation7], 4
          %s193 = int_to_ptr.vmem [resolvable:$true] %s192
          %195 = dma.hbm_to_vmem [thread:$0]  %s191, 32, %s193, [#allocation6]
        $region20: #{tpu_custom_call.1} parent=11 // pred_fallthru
          _
        // Predicated region
        $region21: #{tpu_custom_call.1} parent=11 // pred_check
          %p196 = pneg %p108
        $region22: #{tpu_custom_call.1} parent=11 // pred_check_branch
          %198 = sbr.rel (%p196) target = $region24
        $region23: #{tpu_custom_call.1} parent=11 // pred_region
          %200 = vsyncadd [#allocation9], 0
          %s201 = sshll.u32 %s3, 4
          %s202 = int_to_ptr.hbm [resolvable:$true] %s201
          %s203 = sshll.u32 [#allocation8], 4
          %s204 = int_to_ptr.vmem [resolvable:$true] %s203
          %209 = dma.hbm_to_vmem [thread:$0]  %s202, 2048, %s204, [#allocation9], 64, 64, 4
        $region24: #{tpu_custom_call.1} parent=11 // pred_fallthru
          _
        // Predicated region
        $region25: #{tpu_custom_call.1} parent=11 // pred_check
          %p210 = pneg %p129
        $region26: #{tpu_custom_call.1} parent=11 // pred_check_branch
          %212 = sbr.rel (%p210) target = $region28
        $region27: #{tpu_custom_call.1} parent=11 // pred_region
          _
        $region28: #{tpu_custom_call.1} parent=11 // pred_fallthru
          _
      $region12: #{tpu_custom_call.1} parent=5 // pred_fallthru
        _
      %p213 = scmp.lt.s32.totalorder %s19, 2
      // Predicated region
      $region29: #{tpu_custom_call.1} parent=5 // pred_check
        %p214 = pneg %p213
      $region30: #{tpu_custom_call.1} parent=5 // pred_check_branch
        %216 = sbr.rel (%p214) target = $region32
      $region31: #{tpu_custom_call.1} parent=5 // pred_region
        // Predicated region
        $region33: #{tpu_custom_call.1} parent=31 // pred_check
          %p217 = pneg %p39
        $region34: #{tpu_custom_call.1} parent=31 // pred_check_branch
          %219 = sbr.rel (%p217) target = $region36
        $region35: #{tpu_custom_call.1} parent=31 // pred_region
          %s220 = sand.u32 %s29, 1
          %s221 = scalar_lea.sflag [#allocation3], %s220
          %s222 = sand.u32 %s29, 1
          %s223 = smul.addr %s222, 512
          %s224 = scalar_lea.vmem [#allocation2], %s223
          %s225 = smul.u32 64, %s19
          %227 = vsyncadd %s221, 0
          %s228 = smul.addr %s225, 8
          %s229 = scalar_lea.hbm %s0, %s228
          %s230 = sshll.u32 %s229, 4
          %s231 = int_to_ptr.hbm [resolvable:$true] %s230
          %s232 = sshll.u32 %s224, 4
          %s233 = int_to_ptr.vmem [resolvable:$true] %s232
          %238 = dma.hbm_to_vmem [thread:$0]  %s231, 8192, %s233, %s221, 128, 128, 8
        $region36: #{tpu_custom_call.1} parent=31 // pred_fallthru
          _
      $region32: #{tpu_custom_call.1} parent=5 // pred_fallthru
        _
      %p239 = scmp.le.s32.totalorder 1, %s19
      %p240 = scmp.lt.s32.totalorder %s19, 3
      %p241 = pnand %p239, %p240
      %p242 = pneg %p241
      // Predicated region
      $region37: #{tpu_custom_call.1} parent=5 // pred_check
        _
      $region38: #{tpu_custom_call.1} parent=5 // pred_check_branch
        %244 = sbr.rel (%p241) target = $region40
      $region39: #{tpu_custom_call.1} parent=5 // pred_region
        %s245 = ssub.s32 %s19, 1
        %s246 = sand.u32 %s32, 1
        %s247 = scalar_lea.sflag [#allocation3], %s246
        %s248 = sand.u32 %s32, 1
        %s249 = smul.addr %s248, 512
        %s250 = scalar_lea.vmem [#allocation2], %s249
        // Predicated region
        $region41: #{tpu_custom_call.1} parent=39 // pred_check
          %p251 = pneg %p45
        $region42: #{tpu_custom_call.1} parent=39 // pred_check_branch
          %253 = sbr.rel (%p251) target = $region44
        $region43: #{tpu_custom_call.1} parent=39 // pred_region
          %255 = dma.done %s247, 8192
        $region44: #{tpu_custom_call.1} parent=39 // pred_fallthru
          _
        // Predicated region
        $region45: #{tpu_custom_call.1} parent=39 // pred_check
          %p256 = pneg %p66
        $region46: #{tpu_custom_call.1} parent=39 // pred_check_branch
          %258 = sbr.rel (%p256) target = $region48
        $region47: #{tpu_custom_call.1} parent=39 // pred_region
          %260 = dma.done [#allocation6], 2048
        $region48: #{tpu_custom_call.1} parent=39 // pred_fallthru
          _
        // Predicated region
        $region49: #{tpu_custom_call.1} parent=39 // pred_check
          %p261 = pneg %p87
        $region50: #{tpu_custom_call.1} parent=39 // pred_check_branch
          %263 = sbr.rel (%p261) target = $region52
        $region51: #{tpu_custom_call.1} parent=39 // pred_region
          %265 = dma.done [#allocation6], 32
        $region52: #{tpu_custom_call.1} parent=39 // pred_fallthru
          _
        // Predicated region
        $region53: #{tpu_custom_call.1} parent=39 // pred_check
          %p266 = pneg %p108
        $region54: #{tpu_custom_call.1} parent=39 // pred_check_branch
          %268 = sbr.rel (%p266) target = $region56
        $region55: #{tpu_custom_call.1} parent=39 // pred_region
          %270 = dma.done [#allocation9], 2048
        $region56: #{tpu_custom_call.1} parent=39 // pred_fallthru
          _
        %s271 = sand.u32 %s32, 1
        %s272 = scalar_lea.sflag [#allocation3], %s271
        %s273 = sand.u32 %s32, 1
        %s274 = smul.addr %s273, 512
        %s275 = scalar_lea.vmem [#allocation2], %s274
        %p276 = pneg %p45
        %p277 = pneg %p42
        %p278 = pneg %p66
        %p279 = pneg %p63
        %p280 = pneg %p87
        %p281 = pneg %p84
        %p282 = pneg %p108
        %p283 = pneg %p105
        %p284 = pneg %p129
        %p285 = pneg %p126
        %p286 = pneg %p155
        %p287 = pneg %p152
        %s288 = sand.u32 %s142, 1
        %s289 = scalar_lea.sflag [#allocation4], %s288
        %s290 = sand.u32 %s142, 1
        %s291 = smul.addr %s290, 512
        %s292 = scalar_lea.vmem [#allocation10], %s291
        %s293 = smul.u32 64, %s24
        %s294 = smul.u32 64, %s24
        %v295 = vld [vmem:[%s250] sm:$0xff]
        %v296 = vld [vmem:[%s250 + $0x8] sm:$0xff]
        %v297 = vld [vmem:[%s250 + $0x10] sm:$0xff]
        %v298 = vld [vmem:[%s250 + $0x18] sm:$0xff]
        %v299 = vld [vmem:[%s250 + $0x20] sm:$0xff]
        %v300 = vld [vmem:[%s250 + $0x28] sm:$0xff]
        %v301 = vld [vmem:[%s250 + $0x30] sm:$0xff]
        %v302 = vld [vmem:[%s250 + $0x38] sm:$0xff]
        %v303 = vld [vmem:[%s250 + $0x40] sm:$0xff]
        %v304 = vld [vmem:[%s250 + $0x48] sm:$0xff]
        %v305 = vld [vmem:[%s250 + $0x50] sm:$0xff]
        %v306 = vld [vmem:[%s250 + $0x58] sm:$0xff]
        %v307 = vld [vmem:[%s250 + $0x60] sm:$0xff]
        %v308 = vld [vmem:[%s250 + $0x68] sm:$0xff]
        %v309 = vld [vmem:[%s250 + $0x70] sm:$0xff]
        %v310 = vld [vmem:[%s250 + $0x78] sm:$0xff]
        %v311 = vld [vmem:[%s250 + $0x80] sm:$0xff]
        %v312 = vld [vmem:[%s250 + $0x88] sm:$0xff]
        %v313 = vld [vmem:[%s250 + $0x90] sm:$0xff]
        %v314 = vld [vmem:[%s250 + $0x98] sm:$0xff]
        %v315 = vld [vmem:[%s250 + $0xa0] sm:$0xff]
        %v316 = vld [vmem:[%s250 + $0xa8] sm:$0xff]
        %v317 = vld [vmem:[%s250 + $0xb0] sm:$0xff]
        %v318 = vld [vmem:[%s250 + $0xb8] sm:$0xff]
        %v319 = vld [vmem:[%s250 + $0xc0] sm:$0xff]
        %v320 = vld [vmem:[%s250 + $0xc8] sm:$0xff]
        %v321 = vld [vmem:[%s250 + $0xd0] sm:$0xff]
        %v322 = vld [vmem:[%s250 + $0xd8] sm:$0xff]
        %v323 = vld [vmem:[%s250 + $0xe0] sm:$0xff]
        %v324 = vld [vmem:[%s250 + $0xe8] sm:$0xff]
        %v325 = vld [vmem:[%s250 + $0xf0] sm:$0xff]
        %v326 = vld [vmem:[%s250 + $0xf8] sm:$0xff]
        %v327 = vld [vmem:[%s250 + $0x100] sm:$0xff]
        %v328 = vld [vmem:[%s250 + $0x108] sm:$0xff]
        %v329 = vld [vmem:[%s250 + $0x110] sm:$0xff]
        %v330 = vld [vmem:[%s250 + $0x118] sm:$0xff]
        %v331 = vld [vmem:[%s250 + $0x120] sm:$0xff]
        %v332 = vld [vmem:[%s250 + $0x128] sm:$0xff]
        %v333 = vld [vmem:[%s250 + $0x130] sm:$0xff]
        %v334 = vld [vmem:[%s250 + $0x138] sm:$0xff]
        %v335 = vld [vmem:[%s250 + $0x140] sm:$0xff]
        %v336 = vld [vmem:[%s250 + $0x148] sm:$0xff]
        %v337 = vld [vmem:[%s250 + $0x150] sm:$0xff]
        %v338 = vld [vmem:[%s250 + $0x158] sm:$0xff]
        %v339 = vld [vmem:[%s250 + $0x160] sm:$0xff]
        %v340 = vld [vmem:[%s250 + $0x168] sm:$0xff]
        %v341 = vld [vmem:[%s250 + $0x170] sm:$0xff]
        %v342 = vld [vmem:[%s250 + $0x178] sm:$0xff]
        %v343 = vld [vmem:[%s250 + $0x180] sm:$0xff]
        %v344 = vld [vmem:[%s250 + $0x188] sm:$0xff]
        %v345 = vld [vmem:[%s250 + $0x190] sm:$0xff]
        %v346 = vld [vmem:[%s250 + $0x198] sm:$0xff]
        %v347 = vld [vmem:[%s250 + $0x1a0] sm:$0xff]
        %v348 = vld [vmem:[%s250 + $0x1a8] sm:$0xff]
        %v349 = vld [vmem:[%s250 + $0x1b0] sm:$0xff]
        %v350 = vld [vmem:[%s250 + $0x1b8] sm:$0xff]
        %v351 = vld [vmem:[%s250 + $0x1c0] sm:$0xff]
        %v352 = vld [vmem:[%s250 + $0x1c8] sm:$0xff]
        %v353 = vld [vmem:[%s250 + $0x1d0] sm:$0xff]
        %v354 = vld [vmem:[%s250 + $0x1d8] sm:$0xff]
        %v355 = vld [vmem:[%s250 + $0x1e0] sm:$0xff]
        %v356 = vld [vmem:[%s250 + $0x1e8] sm:$0xff]
        %v357 = vld [vmem:[%s250 + $0x1f0] sm:$0xff]
        %v358 = vld [vmem:[%s250 + $0x1f8] sm:$0xff]
        %v359 = vpack.c.bf16 %v296, %v295
        %v360 = vpack.c.bf16 %v298, %v297
        %v361 = vpack.c.bf16 %v300, %v299
        %v362 = vpack.c.bf16 %v302, %v301
        %v363 = vpack.c.bf16 %v304, %v303
        %v364 = vpack.c.bf16 %v306, %v305
        %v365 = vpack.c.bf16 %v308, %v307
        %v366 = vpack.c.bf16 %v310, %v309
        %v367 = vpack.c.bf16 %v312, %v311
        %v368 = vpack.c.bf16 %v314, %v313
        %v369 = vpack.c.bf16 %v316, %v315
        %v370 = vpack.c.bf16 %v318, %v317
        %v371 = vpack.c.bf16 %v320, %v319
        %v372 = vpack.c.bf16 %v322, %v321
        %v373 = vpack.c.bf16 %v324, %v323
        %v374 = vpack.c.bf16 %v326, %v325
        %v375 = vpack.c.bf16 %v328, %v327
        %v376 = vpack.c.bf16 %v330, %v329
        %v377 = vpack.c.bf16 %v332, %v331
        %v378 = vpack.c.bf16 %v334, %v333
        %v379 = vpack.c.bf16 %v336, %v335
        %v380 = vpack.c.bf16 %v338, %v337
        %v381 = vpack.c.bf16 %v340, %v339
        %v382 = vpack.c.bf16 %v342, %v341
        %v383 = vpack.c.bf16 %v344, %v343
        %v384 = vpack.c.bf16 %v346, %v345
        %v385 = vpack.c.bf16 %v348, %v347
        %v386 = vpack.c.bf16 %v350, %v349
        %v387 = vpack.c.bf16 %v352, %v351
        %v388 = vpack.c.bf16 %v354, %v353
        %v389 = vpack.c.bf16 %v356, %v355
        %v390 = vpack.c.bf16 %v358, %v357
        %v391 = vld [vmem:[#allocation5] sm:$0xff]
        %v392 = vld [vmem:[#allocation5 + $0x8] sm:$0xff]
        %v393 = vld [vmem:[#allocation5 + $0x10] sm:$0xff]
        %v394 = vld [vmem:[#allocation5 + $0x18] sm:$0xff]
        %v395 = vld [vmem:[#allocation5 + $0x20] sm:$0xff]
        %v396 = vld [vmem:[#allocation5 + $0x28] sm:$0xff]
        %v397 = vld [vmem:[#allocation5 + $0x30] sm:$0xff]
        %v398 = vld [vmem:[#allocation5 + $0x38] sm:$0xff]
        %v399 = vld [vmem:[#allocation5 + $0x40] sm:$0xff]
        %v400 = vld [vmem:[#allocation5 + $0x48] sm:$0xff]
        %v401 = vld [vmem:[#allocation5 + $0x50] sm:$0xff]
        %v402 = vld [vmem:[#allocation5 + $0x58] sm:$0xff]
        %v403 = vld [vmem:[#allocation5 + $0x60] sm:$0xff]
        %v404 = vld [vmem:[#allocation5 + $0x68] sm:$0xff]
        %v405 = vld [vmem:[#allocation5 + $0x70] sm:$0xff]
        %v406 = vld [vmem:[#allocation5 + $0x78] sm:$0xff]
        %v407 = vld [vmem:[#allocation7] sm:$0x3]
        %v409 = vperm.slane %v407, 0
        %v410 = vperm.slane %v407, 1
        %v429 = vunpack.c.l.b16 %v391
        %v430 = vunpack.c.h.b16 %v391
        %v431 = vunpack.c.l.b16 %v392
        %v432 = vunpack.c.h.b16 %v392
        %v433 = vunpack.c.l.b16 %v393
        %v434 = vunpack.c.h.b16 %v393
        %v435 = vunpack.c.l.b16 %v394
        %v436 = vunpack.c.h.b16 %v394
        %v437 = vunpack.c.l.b16 %v395
        %v438 = vunpack.c.h.b16 %v395
        %v439 = vunpack.c.l.b16 %v396
        %v440 = vunpack.c.h.b16 %v396
        %v441 = vunpack.c.l.b16 %v397
        %v442 = vunpack.c.h.b16 %v397
        %v443 = vunpack.c.l.b16 %v398
        %v444 = vunpack.c.h.b16 %v398
        %v445 = vunpack.c.l.b16 %v399
        %v446 = vunpack.c.h.b16 %v399
        %v447 = vunpack.c.l.b16 %v400
        %v448 = vunpack.c.h.b16 %v400
        %v449 = vunpack.c.l.b16 %v401
        %v450 = vunpack.c.h.b16 %v401
        %v451 = vunpack.c.l.b16 %v402
        %v452 = vunpack.c.h.b16 %v402
        %v453 = vunpack.c.l.b16 %v403
        %v454 = vunpack.c.h.b16 %v403
        %v455 = vunpack.c.l.b16 %v404
        %v456 = vunpack.c.h.b16 %v404
        %v457 = vunpack.c.l.b16 %v405
        %v458 = vunpack.c.h.b16 %v405
        %v459 = vunpack.c.l.b16 %v406
        %v460 = vunpack.c.h.b16 %v406
        %v461 = vpack.c.b16 %v431, %v429
        %v462 = vpack.c.b16 %v432, %v430
        %v463 = vpack.c.b16 %v435, %v433
        %v464 = vpack.c.b16 %v436, %v434
        %v465 = vpack.c.b16 %v439, %v437
        %v466 = vpack.c.b16 %v440, %v438
        %v467 = vpack.c.b16 %v443, %v441
        %v468 = vpack.c.b16 %v444, %v442
        %v469 = vpack.c.b16 %v447, %v445
        %v470 = vpack.c.b16 %v448, %v446
        %v471 = vpack.c.b16 %v451, %v449
        %v472 = vpack.c.b16 %v452, %v450
        %v473 = vpack.c.b16 %v455, %v453
        %v474 = vpack.c.b16 %v456, %v454
        %v475 = vpack.c.b16 %v459, %v457
        %v476 = vpack.c.b16 %v460, %v458
        %493 = vmatpush.bf16.msra.mxu0 %v475
        %494 = vmatpush.bf16.msra.mxu0 %v473
        %495 = vmatpush.bf16.msra.mxu0 %v471
        %496 = vmatpush.bf16.msra.mxu0 %v469
        %497 = vmatpush.bf16.msra.mxu0 %v467
        %498 = vmatpush.bf16.msra.mxu0 %v465
        %499 = vmatpush.bf16.msra.mxu0 %v463
        %500 = vmatpush.bf16.msra.mxu0 %v461
        %501 = vmatmul.bf16.gmra.mxu0 %v359
        %v502 = vpop.f32.mrf.mxu0
        %v503 = vadd.f32 %v409, %v502
        %v504 = vpop.f32.mrf.mxu0
        %v505 = vadd.f32 %v409, %v504
        %506 = vmatmul.bf16.gmra.mxu0 %v360
        %v507 = vpop.f32.mrf.mxu0
        %v508 = vadd.f32 %v409, %v507
        %v509 = vpop.f32.mrf.mxu0
        %v510 = vadd.f32 %v409, %v509
        %511 = vmatmul.bf16.gmra.mxu0 %v361
        %v512 = vpop.f32.mrf.mxu0
        %v513 = vadd.f32 %v409, %v512
        %v514 = vpop.f32.mrf.mxu0
        %v515 = vadd.f32 %v409, %v514
        %516 = vmatmul.bf16.gmra.mxu0 %v362
        %v517 = vpop.f32.mrf.mxu0
        %v518 = vadd.f32 %v409, %v517
        %v519 = vpop.f32.mrf.mxu0
        %v520 = vadd.f32 %v409, %v519
        %521 = vmatmul.bf16.gmra.mxu0 %v363
        %v522 = vpop.f32.mrf.mxu0
        %v523 = vadd.f32 %v409, %v522
        %v524 = vpop.f32.mrf.mxu0
        %v525 = vadd.f32 %v409, %v524
        %526 = vmatmul.bf16.gmra.mxu0 %v364
        %v527 = vpop.f32.mrf.mxu0
        %v528 = vadd.f32 %v409, %v527
        %v529 = vpop.f32.mrf.mxu0
        %v530 = vadd.f32 %v409, %v529
        %531 = vmatmul.bf16.gmra.mxu0 %v365
        %v532 = vpop.f32.mrf.mxu0
        %v533 = vadd.f32 %v409, %v532
        %v534 = vpop.f32.mrf.mxu0
        %v535 = vadd.f32 %v409, %v534
        %536 = vmatmul.bf16.gmra.mxu0 %v366
        %v537 = vpop.f32.mrf.mxu0
        %v538 = vadd.f32 %v409, %v537
        %v539 = vpop.f32.mrf.mxu0
        %v540 = vadd.f32 %v409, %v539
        %541 = vmatmul.bf16.gmra.mxu0 %v367
        %v542 = vpop.f32.mrf.mxu0
        %v543 = vadd.f32 %v409, %v542
        %v544 = vpop.f32.mrf.mxu0
        %v545 = vadd.f32 %v409, %v544
        %546 = vmatmul.bf16.gmra.mxu0 %v368
        %v547 = vpop.f32.mrf.mxu0
        %v548 = vadd.f32 %v409, %v547
        %v549 = vpop.f32.mrf.mxu0
        %v550 = vadd.f32 %v409, %v549
        %551 = vmatmul.bf16.gmra.mxu0 %v369
        %v552 = vpop.f32.mrf.mxu0
        %v553 = vadd.f32 %v409, %v552
        %v554 = vpop.f32.mrf.mxu0
        %v555 = vadd.f32 %v409, %v554
        %556 = vmatmul.bf16.gmra.mxu0 %v370
        %v557 = vpop.f32.mrf.mxu0
        %v558 = vadd.f32 %v409, %v557
        %v559 = vpop.f32.mrf.mxu0
        %v560 = vadd.f32 %v409, %v559
        %561 = vmatmul.bf16.gmra.mxu0 %v371
        %v562 = vpop.f32.mrf.mxu0
        %v563 = vadd.f32 %v409, %v562
        %v564 = vpop.f32.mrf.mxu0
        %v565 = vadd.f32 %v409, %v564
        %566 = vmatmul.bf16.gmra.mxu0 %v372
        %v567 = vpop.f32.mrf.mxu0
        %v568 = vadd.f32 %v409, %v567
        %v569 = vpop.f32.mrf.mxu0
        %v570 = vadd.f32 %v409, %v569
        %571 = vmatmul.bf16.gmra.mxu0 %v373
        %v572 = vpop.f32.mrf.mxu0
        %v573 = vadd.f32 %v409, %v572
        %v574 = vpop.f32.mrf.mxu0
        %v575 = vadd.f32 %v409, %v574
        %576 = vmatmul.bf16.gmra.mxu0 %v374
        %v577 = vpop.f32.mrf.mxu0
        %v578 = vadd.f32 %v409, %v577
        %v579 = vpop.f32.mrf.mxu0
        %v580 = vadd.f32 %v409, %v579
        %581 = vmatmul.bf16.gmra.mxu0 %v375
        %v582 = vpop.f32.mrf.mxu0
        %v583 = vadd.f32 %v409, %v582
        %v584 = vpop.f32.mrf.mxu0
        %v585 = vadd.f32 %v409, %v584
        %586 = vmatmul.bf16.gmra.mxu0 %v376
        %v587 = vpop.f32.mrf.mxu0
        %v588 = vadd.f32 %v409, %v587
        %v589 = vpop.f32.mrf.mxu0
        %v590 = vadd.f32 %v409, %v589
        %591 = vmatmul.bf16.gmra.mxu0 %v377
        %v592 = vpop.f32.mrf.mxu0
        %v593 = vadd.f32 %v409, %v592
        %v594 = vpop.f32.mrf.mxu0
        %v595 = vadd.f32 %v409, %v594
        %596 = vmatmul.bf16.gmra.mxu0 %v378
        %v597 = vpop.f32.mrf.mxu0
        %v598 = vadd.f32 %v409, %v597
        %v599 = vpop.f32.mrf.mxu0
        %v600 = vadd.f32 %v409, %v599
        %601 = vmatmul.bf16.gmra.mxu0 %v379
        %v602 = vpop.f32.mrf.mxu0
        %v603 = vadd.f32 %v409, %v602
        %v604 = vpop.f32.mrf.mxu0
        %v605 = vadd.f32 %v409, %v604
        %606 = vmatmul.bf16.gmra.mxu0 %v380
        %v607 = vpop.f32.mrf.mxu0
        %v608 = vadd.f32 %v409, %v607
        %v609 = vpop.f32.mrf.mxu0
        %v610 = vadd.f32 %v409, %v609
        %611 = vmatmul.bf16.gmra.mxu0 %v381
        %v612 = vpop.f32.mrf.mxu0
        %v613 = vadd.f32 %v409, %v612
        %v614 = vpop.f32.mrf.mxu0
        %v615 = vadd.f32 %v409, %v614
        %616 = vmatmul.bf16.gmra.mxu0 %v382
        %v617 = vpop.f32.mrf.mxu0
        %v618 = vadd.f32 %v409, %v617
        %v619 = vpop.f32.mrf.mxu0
        %v620 = vadd.f32 %v409, %v619
        %621 = vmatmul.bf16.gmra.mxu0 %v383
        %v622 = vpop.f32.mrf.mxu0
        %v623 = vadd.f32 %v409, %v622
        %v624 = vpop.f32.mrf.mxu0
        %v625 = vadd.f32 %v409, %v624
        %626 = vmatmul.bf16.gmra.mxu0 %v384
        %v627 = vpop.f32.mrf.mxu0
        %v628 = vadd.f32 %v409, %v627
        %v629 = vpop.f32.mrf.mxu0
        %v630 = vadd.f32 %v409, %v629
        %631 = vmatmul.bf16.gmra.mxu0 %v385
        %v632 = vpop.f32.mrf.mxu0
        %v633 = vadd.f32 %v409, %v632
        %v634 = vpop.f32.mrf.mxu0
        %v635 = vadd.f32 %v409, %v634
        %636 = vmatmul.bf16.gmra.mxu0 %v386
        %v637 = vpop.f32.mrf.mxu0
        %v638 = vadd.f32 %v409, %v637
        %v639 = vpop.f32.mrf.mxu0
        %v640 = vadd.f32 %v409, %v639
        %641 = vmatmul.bf16.gmra.mxu0 %v387
        %v642 = vpop.f32.mrf.mxu0
        %v643 = vadd.f32 %v409, %v642
        %v644 = vpop.f32.mrf.mxu0
        %v645 = vadd.f32 %v409, %v644
        %646 = vmatmul.bf16.gmra.mxu0 %v388
        %v647 = vpop.f32.mrf.mxu0
        %v648 = vadd.f32 %v409, %v647
        %v649 = vpop.f32.mrf.mxu0
        %v650 = vadd.f32 %v409, %v649
        %651 = vmatmul.bf16.gmra.mxu0 %v389
        %v652 = vpop.f32.mrf.mxu0
        %v653 = vadd.f32 %v409, %v652
        %v654 = vpop.f32.mrf.mxu0
        %v655 = vadd.f32 %v409, %v654
        %656 = vmatmul.bf16.gmra.mxu0 %v390
        %v657 = vpop.f32.mrf.mxu0
        %v658 = vadd.f32 %v409, %v657
        %v659 = vpop.f32.mrf.mxu0
        %v660 = vadd.f32 %v409, %v659
        %661 = vdwg.mxu0
        %662 = vmatpush.bf16.msra.mxu0 %v476
        %663 = vmatpush.bf16.msra.mxu0 %v474
        %664 = vmatpush.bf16.msra.mxu0 %v472
        %665 = vmatpush.bf16.msra.mxu0 %v470
        %666 = vmatpush.bf16.msra.mxu0 %v468
        %667 = vmatpush.bf16.msra.mxu0 %v466
        %668 = vmatpush.bf16.msra.mxu0 %v464
        %669 = vmatpush.bf16.msra.mxu0 %v462
        %670 = vmatmul.bf16.gmra.mxu0 %v359
        %v671 = vpop.f32.mrf.mxu0
        %v672 = vadd.f32 %v410, %v671
        %v673 = vpop.f32.mrf.mxu0
        %v674 = vadd.f32 %v410, %v673
        %675 = vmatmul.bf16.gmra.mxu0 %v360
        %v676 = vpop.f32.mrf.mxu0
        %v677 = vadd.f32 %v410, %v676
        %v678 = vpop.f32.mrf.mxu0
        %v679 = vadd.f32 %v410, %v678
        %680 = vmatmul.bf16.gmra.mxu0 %v361
        %v681 = vpop.f32.mrf.mxu0
        %v682 = vadd.f32 %v410, %v681
        %v683 = vpop.f32.mrf.mxu0
        %v684 = vadd.f32 %v410, %v683
        %685 = vmatmul.bf16.gmra.mxu0 %v362
        %v686 = vpop.f32.mrf.mxu0
        %v687 = vadd.f32 %v410, %v686
        %v688 = vpop.f32.mrf.mxu0
        %v689 = vadd.f32 %v410, %v688
        %690 = vmatmul.bf16.gmra.mxu0 %v363
        %v691 = vpop.f32.mrf.mxu0
        %v692 = vadd.f32 %v410, %v691
        %v693 = vpop.f32.mrf.mxu0
        %v694 = vadd.f32 %v410, %v693
        %695 = vmatmul.bf16.gmra.mxu0 %v364
        %v696 = vpop.f32.mrf.mxu0
        %v697 = vadd.f32 %v410, %v696
        %v698 = vpop.f32.mrf.mxu0
        %v699 = vadd.f32 %v410, %v698
        %700 = vmatmul.bf16.gmra.mxu0 %v365
        %v701 = vpop.f32.mrf.mxu0
        %v702 = vadd.f32 %v410, %v701
        %v703 = vpop.f32.mrf.mxu0
        %v704 = vadd.f32 %v410, %v703
        %705 = vmatmul.bf16.gmra.mxu0 %v366
        %v706 = vpop.f32.mrf.mxu0
        %v707 = vadd.f32 %v410, %v706
        %v708 = vpop.f32.mrf.mxu0
        %v709 = vadd.f32 %v410, %v708
        %710 = vmatmul.bf16.gmra.mxu0 %v367
        %v711 = vpop.f32.mrf.mxu0
        %v712 = vadd.f32 %v410, %v711
        %v713 = vpop.f32.mrf.mxu0
        %v714 = vadd.f32 %v410, %v713
        %715 = vmatmul.bf16.gmra.mxu0 %v368
        %v716 = vpop.f32.mrf.mxu0
        %v717 = vadd.f32 %v410, %v716
        %v718 = vpop.f32.mrf.mxu0
        %v719 = vadd.f32 %v410, %v718
        %720 = vmatmul.bf16.gmra.mxu0 %v369
        %v721 = vpop.f32.mrf.mxu0
        %v722 = vadd.f32 %v410, %v721
        %v723 = vpop.f32.mrf.mxu0
        %v724 = vadd.f32 %v410, %v723
        %725 = vmatmul.bf16.gmra.mxu0 %v370
        %v726 = vpop.f32.mrf.mxu0
        %v727 = vadd.f32 %v410, %v726
        %v728 = vpop.f32.mrf.mxu0
        %v729 = vadd.f32 %v410, %v728
        %730 = vmatmul.bf16.gmra.mxu0 %v371
        %v731 = vpop.f32.mrf.mxu0
        %v732 = vadd.f32 %v410, %v731
        %v733 = vpop.f32.mrf.mxu0
        %v734 = vadd.f32 %v410, %v733
        %735 = vmatmul.bf16.gmra.mxu0 %v372
        %v736 = vpop.f32.mrf.mxu0
        %v737 = vadd.f32 %v410, %v736
        %v738 = vpop.f32.mrf.mxu0
        %v739 = vadd.f32 %v410, %v738
        %740 = vmatmul.bf16.gmra.mxu0 %v373
        %v741 = vpop.f32.mrf.mxu0
        %v742 = vadd.f32 %v410, %v741
        %v743 = vpop.f32.mrf.mxu0
        %v744 = vadd.f32 %v410, %v743
        %745 = vmatmul.bf16.gmra.mxu0 %v374
        %v746 = vpop.f32.mrf.mxu0
        %v747 = vadd.f32 %v410, %v746
        %v748 = vpop.f32.mrf.mxu0
        %v749 = vadd.f32 %v410, %v748
        %750 = vmatmul.bf16.gmra.mxu0 %v375
        %v751 = vpop.f32.mrf.mxu0
        %v752 = vadd.f32 %v410, %v751
        %v753 = vpop.f32.mrf.mxu0
        %v754 = vadd.f32 %v410, %v753
        %755 = vmatmul.bf16.gmra.mxu0 %v376
        %v756 = vpop.f32.mrf.mxu0
        %v757 = vadd.f32 %v410, %v756
        %v758 = vpop.f32.mrf.mxu0
        %v759 = vadd.f32 %v410, %v758
        %760 = vmatmul.bf16.gmra.mxu0 %v377
        %v761 = vpop.f32.mrf.mxu0
        %v762 = vadd.f32 %v410, %v761
        %v763 = vpop.f32.mrf.mxu0
        %v764 = vadd.f32 %v410, %v763
        %765 = vmatmul.bf16.gmra.mxu0 %v378
        %v766 = vpop.f32.mrf.mxu0
        %v767 = vadd.f32 %v410, %v766
        %v768 = vpop.f32.mrf.mxu0
        %v769 = vadd.f32 %v410, %v768
        %770 = vmatmul.bf16.gmra.mxu0 %v379
        %v771 = vpop.f32.mrf.mxu0
        %v772 = vadd.f32 %v410, %v771
        %v773 = vpop.f32.mrf.mxu0
        %v774 = vadd.f32 %v410, %v773
        %775 = vmatmul.bf16.gmra.mxu0 %v380
        %v776 = vpop.f32.mrf.mxu0
        %v777 = vadd.f32 %v410, %v776
        %v778 = vpop.f32.mrf.mxu0
        %v779 = vadd.f32 %v410, %v778
        %780 = vmatmul.bf16.gmra.mxu0 %v381
        %v781 = vpop.f32.mrf.mxu0
        %v782 = vadd.f32 %v410, %v781
        %v783 = vpop.f32.mrf.mxu0
        %v784 = vadd.f32 %v410, %v783
        %785 = vmatmul.bf16.gmra.mxu0 %v382
        %v786 = vpop.f32.mrf.mxu0
        %v787 = vadd.f32 %v410, %v786
        %v788 = vpop.f32.mrf.mxu0
        %v789 = vadd.f32 %v410, %v788
        %790 = vmatmul.bf16.gmra.mxu0 %v383
        %v791 = vpop.f32.mrf.mxu0
        %v792 = vadd.f32 %v410, %v791
        %v793 = vpop.f32.mrf.mxu0
        %v794 = vadd.f32 %v410, %v793
        %795 = vmatmul.bf16.gmra.mxu0 %v384
        %v796 = vpop.f32.mrf.mxu0
        %v797 = vadd.f32 %v410, %v796
        %v798 = vpop.f32.mrf.mxu0
        %v799 = vadd.f32 %v410, %v798
        %800 = vmatmul.bf16.gmra.mxu0 %v385
        %v801 = vpop.f32.mrf.mxu0
        %v802 = vadd.f32 %v410, %v801
        %v803 = vpop.f32.mrf.mxu0
        %v804 = vadd.f32 %v410, %v803
        %805 = vmatmul.bf16.gmra.mxu0 %v386
        %v806 = vpop.f32.mrf.mxu0
        %v807 = vadd.f32 %v410, %v806
        %v808 = vpop.f32.mrf.mxu0
        %v809 = vadd.f32 %v410, %v808
        %810 = vmatmul.bf16.gmra.mxu0 %v387
        %v811 = vpop.f32.mrf.mxu0
        %v812 = vadd.f32 %v410, %v811
        %v813 = vpop.f32.mrf.mxu0
        %v814 = vadd.f32 %v410, %v813
        %815 = vmatmul.bf16.gmra.mxu0 %v388
        %v816 = vpop.f32.mrf.mxu0
        %v817 = vadd.f32 %v410, %v816
        %v818 = vpop.f32.mrf.mxu0
        %v819 = vadd.f32 %v410, %v818
        %820 = vmatmul.bf16.gmra.mxu0 %v389
        %v821 = vpop.f32.mrf.mxu0
        %v822 = vadd.f32 %v410, %v821
        %v823 = vpop.f32.mrf.mxu0
        %v824 = vadd.f32 %v410, %v823
        %825 = vmatmul.bf16.gmra.mxu0 %v390
        %v826 = vpop.f32.mrf.mxu0
        %v827 = vadd.f32 %v410, %v826
        %v828 = vpop.f32.mrf.mxu0
        %v829 = vadd.f32 %v410, %v828
        %830 = vdwg.mxu0
        %v831 = vmax.f32 %v503, 0.0
        %v832 = vmax.f32 %v672, 0.0
        %v833 = vmax.f32 %v505, 0.0
        %v834 = vmax.f32 %v674, 0.0
        %v835 = vmax.f32 %v508, 0.0
        %v836 = vmax.f32 %v677, 0.0
        %v837 = vmax.f32 %v510, 0.0
        %v838 = vmax.f32 %v679, 0.0
        %v839 = vmax.f32 %v513, 0.0
        %v840 = vmax.f32 %v682, 0.0
        %v841 = vmax.f32 %v515, 0.0
        %v842 = vmax.f32 %v684, 0.0
        %v843 = vmax.f32 %v518, 0.0
        %v844 = vmax.f32 %v687, 0.0
        %v845 = vmax.f32 %v520, 0.0
        %v846 = vmax.f32 %v689, 0.0
        %v847 = vmax.f32 %v523, 0.0
        %v848 = vmax.f32 %v692, 0.0
        %v849 = vmax.f32 %v525, 0.0
        %v850 = vmax.f32 %v694, 0.0
        %v851 = vmax.f32 %v528, 0.0
        %v852 = vmax.f32 %v697, 0.0
        %v853 = vmax.f32 %v530, 0.0
        %v854 = vmax.f32 %v699, 0.0
        %v855 = vmax.f32 %v533, 0.0
        %v856 = vmax.f32 %v702, 0.0
        %v857 = vmax.f32 %v535, 0.0
        %v858 = vmax.f32 %v704, 0.0
        %v859 = vmax.f32 %v538, 0.0
        %v860 = vmax.f32 %v707, 0.0
        %v861 = vmax.f32 %v540, 0.0
        %v862 = vmax.f32 %v709, 0.0
        %v863 = vmax.f32 %v543, 0.0
        %v864 = vmax.f32 %v712, 0.0
        %v865 = vmax.f32 %v545, 0.0
        %v866 = vmax.f32 %v714, 0.0
        %v867 = vmax.f32 %v548, 0.0
        %v868 = vmax.f32 %v717, 0.0
        %v869 = vmax.f32 %v550, 0.0
        %v870 = vmax.f32 %v719, 0.0
        %v871 = vmax.f32 %v553, 0.0
        %v872 = vmax.f32 %v722, 0.0
        %v873 = vmax.f32 %v555, 0.0
        %v874 = vmax.f32 %v724, 0.0
        %v875 = vmax.f32 %v558, 0.0
        %v876 = vmax.f32 %v727, 0.0
        %v877 = vmax.f32 %v560, 0.0
        %v878 = vmax.f32 %v729, 0.0
        %v879 = vmax.f32 %v563, 0.0
        %v880 = vmax.f32 %v732, 0.0
        %v881 = vmax.f32 %v565, 0.0
        %v882 = vmax.f32 %v734, 0.0
        %v883 = vmax.f32 %v568, 0.0
        %v884 = vmax.f32 %v737, 0.0
        %v885 = vmax.f32 %v570, 0.0
        %v886 = vmax.f32 %v739, 0.0
        %v887 = vmax.f32 %v573, 0.0
        %v888 = vmax.f32 %v742, 0.0
        %v889 = vmax.f32 %v575, 0.0
        %v890 = vmax.f32 %v744, 0.0
        %v891 = vmax.f32 %v578, 0.0
        %v892 = vmax.f32 %v747, 0.0
        %v893 = vmax.f32 %v580, 0.0
        %v894 = vmax.f32 %v749, 0.0
        %v895 = vmax.f32 %v583, 0.0
        %v896 = vmax.f32 %v752, 0.0
        %v897 = vmax.f32 %v585, 0.0
        %v898 = vmax.f32 %v754, 0.0
        %v899 = vmax.f32 %v588, 0.0
        %v900 = vmax.f32 %v757, 0.0
        %v901 = vmax.f32 %v590, 0.0
        %v902 = vmax.f32 %v759, 0.0
        %v903 = vmax.f32 %v593, 0.0
        %v904 = vmax.f32 %v762, 0.0
        %v905 = vmax.f32 %v595, 0.0
        %v906 = vmax.f32 %v764, 0.0
        %v907 = vmax.f32 %v598, 0.0
        %v908 = vmax.f32 %v767, 0.0
        %v909 = vmax.f32 %v600, 0.0
        %v910 = vmax.f32 %v769, 0.0
        %v911 = vmax.f32 %v603, 0.0
        %v912 = vmax.f32 %v772, 0.0
        %v913 = vmax.f32 %v605, 0.0
        %v914 = vmax.f32 %v774, 0.0
        %v915 = vmax.f32 %v608, 0.0
        %v916 = vmax.f32 %v777, 0.0
        %v917 = vmax.f32 %v610, 0.0
        %v918 = vmax.f32 %v779, 0.0
        %v919 = vmax.f32 %v613, 0.0
        %v920 = vmax.f32 %v782, 0.0
        %v921 = vmax.f32 %v615, 0.0
        %v922 = vmax.f32 %v784, 0.0
        %v923 = vmax.f32 %v618, 0.0
        %v924 = vmax.f32 %v787, 0.0
        %v925 = vmax.f32 %v620, 0.0
        %v926 = vmax.f32 %v789, 0.0
        %v927 = vmax.f32 %v623, 0.0
        %v928 = vmax.f32 %v792, 0.0
        %v929 = vmax.f32 %v625, 0.0
        %v930 = vmax.f32 %v794, 0.0
        %v931 = vmax.f32 %v628, 0.0
        %v932 = vmax.f32 %v797, 0.0
        %v933 = vmax.f32 %v630, 0.0
        %v934 = vmax.f32 %v799, 0.0
        %v935 = vmax.f32 %v633, 0.0
        %v936 = vmax.f32 %v802, 0.0
        %v937 = vmax.f32 %v635, 0.0
        %v938 = vmax.f32 %v804, 0.0
        %v939 = vmax.f32 %v638, 0.0
        %v940 = vmax.f32 %v807, 0.0
        %v941 = vmax.f32 %v640, 0.0
        %v942 = vmax.f32 %v809, 0.0
        %v943 = vmax.f32 %v643, 0.0
        %v944 = vmax.f32 %v812, 0.0
        %v945 = vmax.f32 %v645, 0.0
        %v946 = vmax.f32 %v814, 0.0
        %v947 = vmax.f32 %v648, 0.0
        %v948 = vmax.f32 %v817, 0.0
        %v949 = vmax.f32 %v650, 0.0
        %v950 = vmax.f32 %v819, 0.0
        %v951 = vmax.f32 %v653, 0.0
        %v952 = vmax.f32 %v822, 0.0
        %v953 = vmax.f32 %v655, 0.0
        %v954 = vmax.f32 %v824, 0.0
        %v955 = vmax.f32 %v658, 0.0
        %v956 = vmax.f32 %v827, 0.0
        %v957 = vmax.f32 %v660, 0.0
        %v958 = vmax.f32 %v829, 0.0
        %v959 = vpack.c.bf16 %v833, %v831
        %v960 = vpack.c.bf16 %v834, %v832
        %v961 = vpack.c.bf16 %v837, %v835
        %v962 = vpack.c.bf16 %v838, %v836
        %v963 = vpack.c.bf16 %v841, %v839
        %v964 = vpack.c.bf16 %v842, %v840
        %v965 = vpack.c.bf16 %v845, %v843
        %v966 = vpack.c.bf16 %v846, %v844
        %v967 = vpack.c.bf16 %v849, %v847
        %v968 = vpack.c.bf16 %v850, %v848
        %v969 = vpack.c.bf16 %v853, %v851
        %v970 = vpack.c.bf16 %v854, %v852
        %v971 = vpack.c.bf16 %v857, %v855
        %v972 = vpack.c.bf16 %v858, %v856
        %v973 = vpack.c.bf16 %v861, %v859
        %v974 = vpack.c.bf16 %v862, %v860
        %v975 = vpack.c.bf16 %v865, %v863
        %v976 = vpack.c.bf16 %v866, %v864
        %v977 = vpack.c.bf16 %v869, %v867
        %v978 = vpack.c.bf16 %v870, %v868
        %v979 = vpack.c.bf16 %v873, %v871
        %v980 = vpack.c.bf16 %v874, %v872
        %v981 = vpack.c.bf16 %v877, %v875
        %v982 = vpack.c.bf16 %v878, %v876
        %v983 = vpack.c.bf16 %v881, %v879
        %v984 = vpack.c.bf16 %v882, %v880
        %v985 = vpack.c.bf16 %v885, %v883
        %v986 = vpack.c.bf16 %v886, %v884
        %v987 = vpack.c.bf16 %v889, %v887
        %v988 = vpack.c.bf16 %v890, %v888
        %v989 = vpack.c.bf16 %v893, %v891
        %v990 = vpack.c.bf16 %v894, %v892
        %v991 = vpack.c.bf16 %v897, %v895
        %v992 = vpack.c.bf16 %v898, %v896
        %v993 = vpack.c.bf16 %v901, %v899
        %v994 = vpack.c.bf16 %v902, %v900
        %v995 = vpack.c.bf16 %v905, %v903
        %v996 = vpack.c.bf16 %v906, %v904
        %v997 = vpack.c.bf16 %v909, %v907
        %v998 = vpack.c.bf16 %v910, %v908
        %v999 = vpack.c.bf16 %v913, %v911
        %v1000 = vpack.c.bf16 %v914, %v912
        %v1001 = vpack.c.bf16 %v917, %v915
        %v1002 = vpack.c.bf16 %v918, %v916
        %v1003 = vpack.c.bf16 %v921, %v919
        %v1004 = vpack.c.bf16 %v922, %v920
        %v1005 = vpack.c.bf16 %v925, %v923
        %v1006 = vpack.c.bf16 %v926, %v924
        %v1007 = vpack.c.bf16 %v929, %v927
        %v1008 = vpack.c.bf16 %v930, %v928
        %v1009 = vpack.c.bf16 %v933, %v931
        %v1010 = vpack.c.bf16 %v934, %v932
        %v1011 = vpack.c.bf16 %v937, %v935
        %v1012 = vpack.c.bf16 %v938, %v936
        %v1013 = vpack.c.bf16 %v941, %v939
        %v1014 = vpack.c.bf16 %v942, %v940
        %v1015 = vpack.c.bf16 %v945, %v943
        %v1016 = vpack.c.bf16 %v946, %v944
        %v1017 = vpack.c.bf16 %v949, %v947
        %v1018 = vpack.c.bf16 %v950, %v948
        %v1019 = vpack.c.bf16 %v953, %v951
        %v1020 = vpack.c.bf16 %v954, %v952
        %v1021 = vpack.c.bf16 %v957, %v955
        %v1022 = vpack.c.bf16 %v958, %v956
        %v1023 = vld [vmem:[#allocation8] sm:$0xf]
        %v1024 = vld [vmem:[#allocation8 + $0x4] sm:$0xf]
        %v1025 = vld [vmem:[#allocation8 + $0x8] sm:$0xf]
        %v1026 = vld [vmem:[#allocation8 + $0xc] sm:$0xf]
        %v1027 = vld [vmem:[#allocation8 + $0x10] sm:$0xf]
        %v1028 = vld [vmem:[#allocation8 + $0x14] sm:$0xf]
        %v1029 = vld [vmem:[#allocation8 + $0x18] sm:$0xf]
        %v1030 = vld [vmem:[#allocation8 + $0x1c] sm:$0xf]
        %v1031 = vld [vmem:[#allocation8 + $0x20] sm:$0xf]
        %v1032 = vld [vmem:[#allocation8 + $0x24] sm:$0xf]
        %v1033 = vld [vmem:[#allocation8 + $0x28] sm:$0xf]
        %v1034 = vld [vmem:[#allocation8 + $0x2c] sm:$0xf]
        %v1035 = vld [vmem:[#allocation8 + $0x30] sm:$0xf]
        %v1036 = vld [vmem:[#allocation8 + $0x34] sm:$0xf]
        %v1037 = vld [vmem:[#allocation8 + $0x38] sm:$0xf]
        %v1038 = vld [vmem:[#allocation8 + $0x3c] sm:$0xf]
        %v1039 = vld [vmem:[#allocation8 + $0x40] sm:$0xf]
        %v1040 = vld [vmem:[#allocation8 + $0x44] sm:$0xf]
        %v1041 = vld [vmem:[#allocation8 + $0x48] sm:$0xf]
        %v1042 = vld [vmem:[#allocation8 + $0x4c] sm:$0xf]
        %v1043 = vld [vmem:[#allocation8 + $0x50] sm:$0xf]
        %v1044 = vld [vmem:[#allocation8 + $0x54] sm:$0xf]
        %v1045 = vld [vmem:[#allocation8 + $0x58] sm:$0xf]
        %v1046 = vld [vmem:[#allocation8 + $0x5c] sm:$0xf]
        %v1047 = vld [vmem:[#allocation8 + $0x60] sm:$0xf]
        %v1048 = vld [vmem:[#allocation8 + $0x64] sm:$0xf]
        %v1049 = vld [vmem:[#allocation8 + $0x68] sm:$0xf]
        %v1050 = vld [vmem:[#allocation8 + $0x6c] sm:$0xf]
        %v1051 = vld [vmem:[#allocation8 + $0x70] sm:$0xf]
        %v1052 = vld [vmem:[#allocation8 + $0x74] sm:$0xf]
        %v1053 = vld [vmem:[#allocation8 + $0x78] sm:$0xf]
        %v1054 = vld [vmem:[#allocation8 + $0x7c] sm:$0xf]
        %v1055 = vld [vmem:[%s4] sm:$0x1]
        %v1057 = vperm.slane %v1055, 0
        %v1091 = vunpack.c.l.b16 %v1023
        %v1092 = vunpack.c.l.b16 %v1024
        %v1093 = vunpack.c.l.b16 %v1025
        %v1094 = vunpack.c.l.b16 %v1026
        %v1095 = vunpack.c.l.b16 %v1027
        %v1096 = vunpack.c.l.b16 %v1028
        %v1097 = vunpack.c.l.b16 %v1029
        %v1098 = vunpack.c.l.b16 %v1030
        %v1099 = vunpack.c.l.b16 %v1031
        %v1100 = vunpack.c.l.b16 %v1032
        %v1101 = vunpack.c.l.b16 %v1033
        %v1102 = vunpack.c.l.b16 %v1034
        %v1103 = vunpack.c.l.b16 %v1035
        %v1104 = vunpack.c.l.b16 %v1036
        %v1105 = vunpack.c.l.b16 %v1037
        %v1106 = vunpack.c.l.b16 %v1038
        %v1107 = vunpack.c.l.b16 %v1039
        %v1108 = vunpack.c.l.b16 %v1040
        %v1109 = vunpack.c.l.b16 %v1041
        %v1110 = vunpack.c.l.b16 %v1042
        %v1111 = vunpack.c.l.b16 %v1043
        %v1112 = vunpack.c.l.b16 %v1044
        %v1113 = vunpack.c.l.b16 %v1045
        %v1114 = vunpack.c.l.b16 %v1046
        %v1115 = vunpack.c.l.b16 %v1047
        %v1116 = vunpack.c.l.b16 %v1048
        %v1117 = vunpack.c.l.b16 %v1049
        %v1118 = vunpack.c.l.b16 %v1050
        %v1119 = vunpack.c.l.b16 %v1051
        %v1120 = vunpack.c.l.b16 %v1052
        %v1121 = vunpack.c.l.b16 %v1053
        %v1122 = vunpack.c.l.b16 %v1054
        %v1123 = vpack.c.b16 %v1092, %v1091
        %v1124 = vpack.c.b16 %v1094, %v1093
        %v1125 = vpack.c.b16 %v1096, %v1095
        %v1126 = vpack.c.b16 %v1098, %v1097
        %v1127 = vpack.c.b16 %v1100, %v1099
        %v1128 = vpack.c.b16 %v1102, %v1101
        %v1129 = vpack.c.b16 %v1104, %v1103
        %v1130 = vpack.c.b16 %v1106, %v1105
        %v1131 = vpack.c.b16 %v1108, %v1107
        %v1132 = vpack.c.b16 %v1110, %v1109
        %v1133 = vpack.c.b16 %v1112, %v1111
        %v1134 = vpack.c.b16 %v1114, %v1113
        %v1135 = vpack.c.b16 %v1116, %v1115
        %v1136 = vpack.c.b16 %v1118, %v1117
        %v1137 = vpack.c.b16 %v1120, %v1119
        %v1138 = vpack.c.b16 %v1122, %v1121
        %1155 = vmatpush.bf16.msra.mxu0 %v1130
        %1156 = vmatpush.bf16.msra.mxu0 %v1129
        %1157 = vmatpush.bf16.msra.mxu0 %v1128
        %1158 = vmatpush.bf16.msra.mxu0 %v1127
        %1159 = vmatpush.bf16.msra.mxu0 %v1126
        %1160 = vmatpush.bf16.msra.mxu0 %v1125
        %1161 = vmatpush.bf16.msra.mxu0 %v1124
        %1162 = vmatpush.bf16.msra.mxu0 %v1123
        %1163 = vmatmul.bf16.gmra.mxu0 %v959
        %v1164 = vpop.f32.mrf.mxu0
        %v1165 = vadd.f32 %v1057, %v1164
        %v1166 = vpop.f32.mrf.mxu0
        %v1167 = vadd.f32 %v1057, %v1166
        %1168 = vmatmul.bf16.gmra.mxu0 %v961
        %v1169 = vpop.f32.mrf.mxu0
        %v1170 = vadd.f32 %v1057, %v1169
        %v1171 = vpop.f32.mrf.mxu0
        %v1172 = vadd.f32 %v1057, %v1171
        %1173 = vmatmul.bf16.gmra.mxu0 %v963
        %v1174 = vpop.f32.mrf.mxu0
        %v1175 = vadd.f32 %v1057, %v1174
        %v1176 = vpop.f32.mrf.mxu0
        %v1177 = vadd.f32 %v1057, %v1176
        %1178 = vmatmul.bf16.gmra.mxu0 %v965
        %v1179 = vpop.f32.mrf.mxu0
        %v1180 = vadd.f32 %v1057, %v1179
        %v1181 = vpop.f32.mrf.mxu0
        %v1182 = vadd.f32 %v1057, %v1181
        %1183 = vmatmul.bf16.gmra.mxu0 %v967
        %v1184 = vpop.f32.mrf.mxu0
        %v1185 = vadd.f32 %v1057, %v1184
        %v1186 = vpop.f32.mrf.mxu0
        %v1187 = vadd.f32 %v1057, %v1186
        %1188 = vmatmul.bf16.gmra.mxu0 %v969
        %v1189 = vpop.f32.mrf.mxu0
        %v1190 = vadd.f32 %v1057, %v1189
        %v1191 = vpop.f32.mrf.mxu0
        %v1192 = vadd.f32 %v1057, %v1191
        %1193 = vmatmul.bf16.gmra.mxu0 %v971
        %v1194 = vpop.f32.mrf.mxu0
        %v1195 = vadd.f32 %v1057, %v1194
        %v1196 = vpop.f32.mrf.mxu0
        %v1197 = vadd.f32 %v1057, %v1196
        %1198 = vmatmul.bf16.gmra.mxu0 %v973
        %v1199 = vpop.f32.mrf.mxu0
        %v1200 = vadd.f32 %v1057, %v1199
        %v1201 = vpop.f32.mrf.mxu0
        %v1202 = vadd.f32 %v1057, %v1201
        %1203 = vmatmul.bf16.gmra.mxu0 %v975
        %v1204 = vpop.f32.mrf.mxu0
        %v1205 = vadd.f32 %v1057, %v1204
        %v1206 = vpop.f32.mrf.mxu0
        %v1207 = vadd.f32 %v1057, %v1206
        %1208 = vmatmul.bf16.gmra.mxu0 %v977
        %v1209 = vpop.f32.mrf.mxu0
        %v1210 = vadd.f32 %v1057, %v1209
        %v1211 = vpop.f32.mrf.mxu0
        %v1212 = vadd.f32 %v1057, %v1211
        %1213 = vmatmul.bf16.gmra.mxu0 %v979
        %v1214 = vpop.f32.mrf.mxu0
        %v1215 = vadd.f32 %v1057, %v1214
        %v1216 = vpop.f32.mrf.mxu0
        %v1217 = vadd.f32 %v1057, %v1216
        %1218 = vmatmul.bf16.gmra.mxu0 %v981
        %v1219 = vpop.f32.mrf.mxu0
        %v1220 = vadd.f32 %v1057, %v1219
        %v1221 = vpop.f32.mrf.mxu0
        %v1222 = vadd.f32 %v1057, %v1221
        %1223 = vmatmul.bf16.gmra.mxu0 %v983
        %v1224 = vpop.f32.mrf.mxu0
        %v1225 = vadd.f32 %v1057, %v1224
        %v1226 = vpop.f32.mrf.mxu0
        %v1227 = vadd.f32 %v1057, %v1226
        %1228 = vmatmul.bf16.gmra.mxu0 %v985
        %v1229 = vpop.f32.mrf.mxu0
        %v1230 = vadd.f32 %v1057, %v1229
        %v1231 = vpop.f32.mrf.mxu0
        %v1232 = vadd.f32 %v1057, %v1231
        %1233 = vmatmul.bf16.gmra.mxu0 %v987
        %v1234 = vpop.f32.mrf.mxu0
        %v1235 = vadd.f32 %v1057, %v1234
        %v1236 = vpop.f32.mrf.mxu0
        %v1237 = vadd.f32 %v1057, %v1236
        %1238 = vmatmul.bf16.gmra.mxu0 %v989
        %v1239 = vpop.f32.mrf.mxu0
        %v1240 = vadd.f32 %v1057, %v1239
        %v1241 = vpop.f32.mrf.mxu0
        %v1242 = vadd.f32 %v1057, %v1241
        %1243 = vmatmul.bf16.gmra.mxu0 %v991
        %v1244 = vpop.f32.mrf.mxu0
        %v1245 = vadd.f32 %v1057, %v1244
        %v1246 = vpop.f32.mrf.mxu0
        %v1247 = vadd.f32 %v1057, %v1246
        %1248 = vmatmul.bf16.gmra.mxu0 %v993
        %v1249 = vpop.f32.mrf.mxu0
        %v1250 = vadd.f32 %v1057, %v1249
        %v1251 = vpop.f32.mrf.mxu0
        %v1252 = vadd.f32 %v1057, %v1251
        %1253 = vmatmul.bf16.gmra.mxu0 %v995
        %v1254 = vpop.f32.mrf.mxu0
        %v1255 = vadd.f32 %v1057, %v1254
        %v1256 = vpop.f32.mrf.mxu0
        %v1257 = vadd.f32 %v1057, %v1256
        %1258 = vmatmul.bf16.gmra.mxu0 %v997
        %v1259 = vpop.f32.mrf.mxu0
        %v1260 = vadd.f32 %v1057, %v1259
        %v1261 = vpop.f32.mrf.mxu0
        %v1262 = vadd.f32 %v1057, %v1261
        %1263 = vmatmul.bf16.gmra.mxu0 %v999
        %v1264 = vpop.f32.mrf.mxu0
        %v1265 = vadd.f32 %v1057, %v1264
        %v1266 = vpop.f32.mrf.mxu0
        %v1267 = vadd.f32 %v1057, %v1266
        %1268 = vmatmul.bf16.gmra.mxu0 %v1001
        %v1269 = vpop.f32.mrf.mxu0
        %v1270 = vadd.f32 %v1057, %v1269
        %v1271 = vpop.f32.mrf.mxu0
        %v1272 = vadd.f32 %v1057, %v1271
        %1273 = vmatmul.bf16.gmra.mxu0 %v1003
        %v1274 = vpop.f32.mrf.mxu0
        %v1275 = vadd.f32 %v1057, %v1274
        %v1276 = vpop.f32.mrf.mxu0
        %v1277 = vadd.f32 %v1057, %v1276
        %1278 = vmatmul.bf16.gmra.mxu0 %v1005
        %v1279 = vpop.f32.mrf.mxu0
        %v1280 = vadd.f32 %v1057, %v1279
        %v1281 = vpop.f32.mrf.mxu0
        %v1282 = vadd.f32 %v1057, %v1281
        %1283 = vmatmul.bf16.gmra.mxu0 %v1007
        %v1284 = vpop.f32.mrf.mxu0
        %v1285 = vadd.f32 %v1057, %v1284
        %v1286 = vpop.f32.mrf.mxu0
        %v1287 = vadd.f32 %v1057, %v1286
        %1288 = vmatmul.bf16.gmra.mxu0 %v1009
        %v1289 = vpop.f32.mrf.mxu0
        %v1290 = vadd.f32 %v1057, %v1289
        %v1291 = vpop.f32.mrf.mxu0
        %v1292 = vadd.f32 %v1057, %v1291
        %1293 = vmatmul.bf16.gmra.mxu0 %v1011
        %v1294 = vpop.f32.mrf.mxu0
        %v1295 = vadd.f32 %v1057, %v1294
        %v1296 = vpop.f32.mrf.mxu0
        %v1297 = vadd.f32 %v1057, %v1296
        %1298 = vmatmul.bf16.gmra.mxu0 %v1013
        %v1299 = vpop.f32.mrf.mxu0
        %v1300 = vadd.f32 %v1057, %v1299
        %v1301 = vpop.f32.mrf.mxu0
        %v1302 = vadd.f32 %v1057, %v1301
        %1303 = vmatmul.bf16.gmra.mxu0 %v1015
        %v1304 = vpop.f32.mrf.mxu0
        %v1305 = vadd.f32 %v1057, %v1304
        %v1306 = vpop.f32.mrf.mxu0
        %v1307 = vadd.f32 %v1057, %v1306
        %1308 = vmatmul.bf16.gmra.mxu0 %v1017
        %v1309 = vpop.f32.mrf.mxu0
        %v1310 = vadd.f32 %v1057, %v1309
        %v1311 = vpop.f32.mrf.mxu0
        %v1312 = vadd.f32 %v1057, %v1311
        %1313 = vmatmul.bf16.gmra.mxu0 %v1019
        %v1314 = vpop.f32.mrf.mxu0
        %v1315 = vadd.f32 %v1057, %v1314
        %v1316 = vpop.f32.mrf.mxu0
        %v1317 = vadd.f32 %v1057, %v1316
        %1318 = vmatmul.bf16.gmra.mxu0 %v1021
        %v1319 = vpop.f32.mrf.mxu0
        %v1320 = vadd.f32 %v1057, %v1319
        %v1321 = vpop.f32.mrf.mxu0
        %v1322 = vadd.f32 %v1057, %v1321
        %1323 = vdwg.mxu0
        %1324 = vmatpush.bf16.msra.mxu0 %v1138
        %1325 = vmatpush.bf16.msra.mxu0 %v1137
        %1326 = vmatpush.bf16.msra.mxu0 %v1136
        %1327 = vmatpush.bf16.msra.mxu0 %v1135
        %1328 = vmatpush.bf16.msra.mxu0 %v1134
        %1329 = vmatpush.bf16.msra.mxu0 %v1133
        %1330 = vmatpush.bf16.msra.mxu0 %v1132
        %1331 = vmatpush.bf16.msra.mxu0 %v1131
        %1332 = vmatmul.bf16.gmra.mxu0 %v960
        %v1333 = vpop.f32.mrf.mxu0
        %v1334 = vadd.f32 %v1165, %v1333
        %v1335 = vpop.f32.mrf.mxu0
        %v1336 = vadd.f32 %v1167, %v1335
        %1337 = vmatmul.bf16.gmra.mxu0 %v962
        %v1338 = vpop.f32.mrf.mxu0
        %v1339 = vadd.f32 %v1170, %v1338
        %v1340 = vpop.f32.mrf.mxu0
        %v1341 = vadd.f32 %v1172, %v1340
        %1342 = vmatmul.bf16.gmra.mxu0 %v964
        %v1343 = vpop.f32.mrf.mxu0
        %v1344 = vadd.f32 %v1175, %v1343
        %v1345 = vpop.f32.mrf.mxu0
        %v1346 = vadd.f32 %v1177, %v1345
        %1347 = vmatmul.bf16.gmra.mxu0 %v966
        %v1348 = vpop.f32.mrf.mxu0
        %v1349 = vadd.f32 %v1180, %v1348
        %v1350 = vpop.f32.mrf.mxu0
        %v1351 = vadd.f32 %v1182, %v1350
        %1352 = vmatmul.bf16.gmra.mxu0 %v968
        %v1353 = vpop.f32.mrf.mxu0
        %v1354 = vadd.f32 %v1185, %v1353
        %v1355 = vpop.f32.mrf.mxu0
        %v1356 = vadd.f32 %v1187, %v1355
        %1357 = vmatmul.bf16.gmra.mxu0 %v970
        %v1358 = vpop.f32.mrf.mxu0
        %v1359 = vadd.f32 %v1190, %v1358
        %v1360 = vpop.f32.mrf.mxu0
        %v1361 = vadd.f32 %v1192, %v1360
        %1362 = vmatmul.bf16.gmra.mxu0 %v972
        %v1363 = vpop.f32.mrf.mxu0
        %v1364 = vadd.f32 %v1195, %v1363
        %v1365 = vpop.f32.mrf.mxu0
        %v1366 = vadd.f32 %v1197, %v1365
        %1367 = vmatmul.bf16.gmra.mxu0 %v974
        %v1368 = vpop.f32.mrf.mxu0
        %v1369 = vadd.f32 %v1200, %v1368
        %v1370 = vpop.f32.mrf.mxu0
        %v1371 = vadd.f32 %v1202, %v1370
        %1372 = vmatmul.bf16.gmra.mxu0 %v976
        %v1373 = vpop.f32.mrf.mxu0
        %v1374 = vadd.f32 %v1205, %v1373
        %v1375 = vpop.f32.mrf.mxu0
        %v1376 = vadd.f32 %v1207, %v1375
        %1377 = vmatmul.bf16.gmra.mxu0 %v978
        %v1378 = vpop.f32.mrf.mxu0
        %v1379 = vadd.f32 %v1210, %v1378
        %v1380 = vpop.f32.mrf.mxu0
        %v1381 = vadd.f32 %v1212, %v1380
        %1382 = vmatmul.bf16.gmra.mxu0 %v980
        %v1383 = vpop.f32.mrf.mxu0
        %v1384 = vadd.f32 %v1215, %v1383
        %v1385 = vpop.f32.mrf.mxu0
        %v1386 = vadd.f32 %v1217, %v1385
        %1387 = vmatmul.bf16.gmra.mxu0 %v982
        %v1388 = vpop.f32.mrf.mxu0
        %v1389 = vadd.f32 %v1220, %v1388
        %v1390 = vpop.f32.mrf.mxu0
        %v1391 = vadd.f32 %v1222, %v1390
        %1392 = vmatmul.bf16.gmra.mxu0 %v984
        %v1393 = vpop.f32.mrf.mxu0
        %v1394 = vadd.f32 %v1225, %v1393
        %v1395 = vpop.f32.mrf.mxu0
        %v1396 = vadd.f32 %v1227, %v1395
        %1397 = vmatmul.bf16.gmra.mxu0 %v986
        %v1398 = vpop.f32.mrf.mxu0
        %v1399 = vadd.f32 %v1230, %v1398
        %v1400 = vpop.f32.mrf.mxu0
        %v1401 = vadd.f32 %v1232, %v1400
        %1402 = vmatmul.bf16.gmra.mxu0 %v988
        %v1403 = vpop.f32.mrf.mxu0
        %v1404 = vadd.f32 %v1235, %v1403
        %v1405 = vpop.f32.mrf.mxu0
        %v1406 = vadd.f32 %v1237, %v1405
        %1407 = vmatmul.bf16.gmra.mxu0 %v990
        %v1408 = vpop.f32.mrf.mxu0
        %v1409 = vadd.f32 %v1240, %v1408
        %v1410 = vpop.f32.mrf.mxu0
        %v1411 = vadd.f32 %v1242, %v1410
        %1412 = vmatmul.bf16.gmra.mxu0 %v992
        %v1413 = vpop.f32.mrf.mxu0
        %v1414 = vadd.f32 %v1245, %v1413
        %v1415 = vpop.f32.mrf.mxu0
        %v1416 = vadd.f32 %v1247, %v1415
        %1417 = vmatmul.bf16.gmra.mxu0 %v994
        %v1418 = vpop.f32.mrf.mxu0
        %v1419 = vadd.f32 %v1250, %v1418
        %v1420 = vpop.f32.mrf.mxu0
        %v1421 = vadd.f32 %v1252, %v1420
        %1422 = vmatmul.bf16.gmra.mxu0 %v996
        %v1423 = vpop.f32.mrf.mxu0
        %v1424 = vadd.f32 %v1255, %v1423
        %v1425 = vpop.f32.mrf.mxu0
        %v1426 = vadd.f32 %v1257, %v1425
        %1427 = vmatmul.bf16.gmra.mxu0 %v998
        %v1428 = vpop.f32.mrf.mxu0
        %v1429 = vadd.f32 %v1260, %v1428
        %v1430 = vpop.f32.mrf.mxu0
        %v1431 = vadd.f32 %v1262, %v1430
        %1432 = vmatmul.bf16.gmra.mxu0 %v1000
        %v1433 = vpop.f32.mrf.mxu0
        %v1434 = vadd.f32 %v1265, %v1433
        %v1435 = vpop.f32.mrf.mxu0
        %v1436 = vadd.f32 %v1267, %v1435
        %1437 = vmatmul.bf16.gmra.mxu0 %v1002
        %v1438 = vpop.f32.mrf.mxu0
        %v1439 = vadd.f32 %v1270, %v1438
        %v1440 = vpop.f32.mrf.mxu0
        %v1441 = vadd.f32 %v1272, %v1440
        %1442 = vmatmul.bf16.gmra.mxu0 %v1004
        %v1443 = vpop.f32.mrf.mxu0
        %v1444 = vadd.f32 %v1275, %v1443
        %v1445 = vpop.f32.mrf.mxu0
        %v1446 = vadd.f32 %v1277, %v1445
        %1447 = vmatmul.bf16.gmra.mxu0 %v1006
        %v1448 = vpop.f32.mrf.mxu0
        %v1449 = vadd.f32 %v1280, %v1448
        %v1450 = vpop.f32.mrf.mxu0
        %v1451 = vadd.f32 %v1282, %v1450
        %1452 = vmatmul.bf16.gmra.mxu0 %v1008
        %v1453 = vpop.f32.mrf.mxu0
        %v1454 = vadd.f32 %v1285, %v1453
        %v1455 = vpop.f32.mrf.mxu0
        %v1456 = vadd.f32 %v1287, %v1455
        %1457 = vmatmul.bf16.gmra.mxu0 %v1010
        %v1458 = vpop.f32.mrf.mxu0
        %v1459 = vadd.f32 %v1290, %v1458
        %v1460 = vpop.f32.mrf.mxu0
        %v1461 = vadd.f32 %v1292, %v1460
        %1462 = vmatmul.bf16.gmra.mxu0 %v1012
        %v1463 = vpop.f32.mrf.mxu0
        %v1464 = vadd.f32 %v1295, %v1463
        %v1465 = vpop.f32.mrf.mxu0
        %v1466 = vadd.f32 %v1297, %v1465
        %1467 = vmatmul.bf16.gmra.mxu0 %v1014
        %v1468 = vpop.f32.mrf.mxu0
        %v1469 = vadd.f32 %v1300, %v1468
        %v1470 = vpop.f32.mrf.mxu0
        %v1471 = vadd.f32 %v1302, %v1470
        %1472 = vmatmul.bf16.gmra.mxu0 %v1016
        %v1473 = vpop.f32.mrf.mxu0
        %v1474 = vadd.f32 %v1305, %v1473
        %v1475 = vpop.f32.mrf.mxu0
        %v1476 = vadd.f32 %v1307, %v1475
        %1477 = vmatmul.bf16.gmra.mxu0 %v1018
        %v1478 = vpop.f32.mrf.mxu0
        %v1479 = vadd.f32 %v1310, %v1478
        %v1480 = vpop.f32.mrf.mxu0
        %v1481 = vadd.f32 %v1312, %v1480
        %1482 = vmatmul.bf16.gmra.mxu0 %v1020
        %v1483 = vpop.f32.mrf.mxu0
        %v1484 = vadd.f32 %v1315, %v1483
        %v1485 = vpop.f32.mrf.mxu0
        %v1486 = vadd.f32 %v1317, %v1485
        %1487 = vmatmul.bf16.gmra.mxu0 %v1022
        %v1488 = vpop.f32.mrf.mxu0
        %v1489 = vadd.f32 %v1320, %v1488
        %v1490 = vpop.f32.mrf.mxu0
        %v1491 = vadd.f32 %v1322, %v1490
        %1492 = vdwg.mxu0
        %1493 = vst [vmem:[%s292] sm:$0xff] %v1334
        %1494 = vst [vmem:[%s292 + $0x8] sm:$0xff] %v1336
        %1495 = vst [vmem:[%s292 + $0x10] sm:$0xff] %v1339
        %1496 = vst [vmem:[%s292 + $0x18] sm:$0xff] %v1341
        %1497 = vst [vmem:[%s292 + $0x20] sm:$0xff] %v1344
        %1498 = vst [vmem:[%s292 + $0x28] sm:$0xff] %v1346
        %1499 = vst [vmem:[%s292 + $0x30] sm:$0xff] %v1349
        %1500 = vst [vmem:[%s292 + $0x38] sm:$0xff] %v1351
        %1501 = vst [vmem:[%s292 + $0x40] sm:$0xff] %v1354
        %1502 = vst [vmem:[%s292 + $0x48] sm:$0xff] %v1356
        %1503 = vst [vmem:[%s292 + $0x50] sm:$0xff] %v1359
        %1504 = vst [vmem:[%s292 + $0x58] sm:$0xff] %v1361
        %1505 = vst [vmem:[%s292 + $0x60] sm:$0xff] %v1364
        %1506 = vst [vmem:[%s292 + $0x68] sm:$0xff] %v1366
        %1507 = vst [vmem:[%s292 + $0x70] sm:$0xff] %v1369
        %1508 = vst [vmem:[%s292 + $0x78] sm:$0xff] %v1371
        %1509 = vst [vmem:[%s292 + $0x80] sm:$0xff] %v1374
        %1510 = vst [vmem:[%s292 + $0x88] sm:$0xff] %v1376
        %1511 = vst [vmem:[%s292 + $0x90] sm:$0xff] %v1379
        %1512 = vst [vmem:[%s292 + $0x98] sm:$0xff] %v1381
        %1513 = vst [vmem:[%s292 + $0xa0] sm:$0xff] %v1384
        %1514 = vst [vmem:[%s292 + $0xa8] sm:$0xff] %v1386
        %1515 = vst [vmem:[%s292 + $0xb0] sm:$0xff] %v1389
        %1516 = vst [vmem:[%s292 + $0xb8] sm:$0xff] %v1391
        %1517 = vst [vmem:[%s292 + $0xc0] sm:$0xff] %v1394
        %1518 = vst [vmem:[%s292 + $0xc8] sm:$0xff] %v1396
        %1519 = vst [vmem:[%s292 + $0xd0] sm:$0xff] %v1399
        %1520 = vst [vmem:[%s292 + $0xd8] sm:$0xff] %v1401
        %1521 = vst [vmem:[%s292 + $0xe0] sm:$0xff] %v1404
        %1522 = vst [vmem:[%s292 + $0xe8] sm:$0xff] %v1406
        %1523 = vst [vmem:[%s292 + $0xf0] sm:$0xff] %v1409
        %1524 = vst [vmem:[%s292 + $0xf8] sm:$0xff] %v1411
        %1525 = vst [vmem:[%s292 + $0x100] sm:$0xff] %v1414
        %1526 = vst [vmem:[%s292 + $0x108] sm:$0xff] %v1416
        %1527 = vst [vmem:[%s292 + $0x110] sm:$0xff] %v1419
        %1528 = vst [vmem:[%s292 + $0x118] sm:$0xff] %v1421
        %1529 = vst [vmem:[%s292 + $0x120] sm:$0xff] %v1424
        %1530 = vst [vmem:[%s292 + $0x128] sm:$0xff] %v1426
        %1531 = vst [vmem:[%s292 + $0x130] sm:$0xff] %v1429
        %1532 = vst [vmem:[%s292 + $0x138] sm:$0xff] %v1431
        %1533 = vst [vmem:[%s292 + $0x140] sm:$0xff] %v1434
        %1534 = vst [vmem:[%s292 + $0x148] sm:$0xff] %v1436
        %1535 = vst [vmem:[%s292 + $0x150] sm:$0xff] %v1439
        %1536 = vst [vmem:[%s292 + $0x158] sm:$0xff] %v1441
        %1537 = vst [vmem:[%s292 + $0x160] sm:$0xff] %v1444
        %1538 = vst [vmem:[%s292 + $0x168] sm:$0xff] %v1446
        %1539 = vst [vmem:[%s292 + $0x170] sm:$0xff] %v1449
        %1540 = vst [vmem:[%s292 + $0x178] sm:$0xff] %v1451
        %1541 = vst [vmem:[%s292 + $0x180] sm:$0xff] %v1454
        %1542 = vst [vmem:[%s292 + $0x188] sm:$0xff] %v1456
        %1543 = vst [vmem:[%s292 + $0x190] sm:$0xff] %v1459
        %1544 = vst [vmem:[%s292 + $0x198] sm:$0xff] %v1461
        %1545 = vst [vmem:[%s292 + $0x1a0] sm:$0xff] %v1464
        %1546 = vst [vmem:[%s292 + $0x1a8] sm:$0xff] %v1466
        %1547 = vst [vmem:[%s292 + $0x1b0] sm:$0xff] %v1469
        %1548 = vst [vmem:[%s292 + $0x1b8] sm:$0xff] %v1471
        %1549 = vst [vmem:[%s292 + $0x1c0] sm:$0xff] %v1474
        %1550 = vst [vmem:[%s292 + $0x1c8] sm:$0xff] %v1476
        %1551 = vst [vmem:[%s292 + $0x1d0] sm:$0xff] %v1479
        %1552 = vst [vmem:[%s292 + $0x1d8] sm:$0xff] %v1481
        %1553 = vst [vmem:[%s292 + $0x1e0] sm:$0xff] %v1484
        %1554 = vst [vmem:[%s292 + $0x1e8] sm:$0xff] %v1486
        %1555 = vst [vmem:[%s292 + $0x1f0] sm:$0xff] %v1489
        %1556 = vst [vmem:[%s292 + $0x1f8] sm:$0xff] %v1491
        %s1557 = sand.u32 %s142, 1
        %s1558 = scalar_lea.sflag [#allocation4], %s1557
        %s1559 = sand.u32 %s142, 1
        %s1560 = smul.addr %s1559, 512
        %s1561 = scalar_lea.vmem [#allocation10], %s1560
        // Predicated region
        $region57: #{tpu_custom_call.1} parent=39 // pred_check
          %p1562 = pneg %p152
        $region58: #{tpu_custom_call.1} parent=39 // pred_check_branch
          %1564 = sbr.rel (%p1562) target = $region60
        $region59: #{tpu_custom_call.1} parent=39 // pred_region
          %s1565 = smul.u32 64, %s24
          %1567 = vsyncadd %s1558, 0
          %s1568 = smul.addr %s1565, 8
          %s1569 = scalar_lea.hbm %s5, %s1568
          %s1570 = sshll.u32 %s1561, 4
          %s1571 = int_to_ptr.vmem [resolvable:$true] %s1570
          %s1572 = sshll.u32 %s1569, 4
          %s1573 = int_to_ptr.hbm [resolvable:$true] %s1572
          %1578 = dma.vmem_to_hbm [thread:$0]  %s1571, 8192, %s1573, %s1558, 128, 128, 8
        $region60: #{tpu_custom_call.1} parent=39 // pred_fallthru
          _
      $region40: #{tpu_custom_call.1} parent=5 // pred_fallthru
        _
      %p1579 = scmp.le.s32.totalorder 2, %s19
      // Predicated region
      $region61: #{tpu_custom_call.1} parent=5 // pred_check
        %p1580 = pneg %p1579
      $region62: #{tpu_custom_call.1} parent=5 // pred_check_branch
        %1582 = sbr.rel (%p1580) target = $region64
      $region63: #{tpu_custom_call.1} parent=5 // pred_region
        %s1583 = ssub.s32 %s19, 2
        // Predicated region
        $region65: #{tpu_custom_call.1} parent=63 // pred_check
          %p1584 = pneg %p158
        $region66: #{tpu_custom_call.1} parent=63 // pred_check_branch
          %1586 = sbr.rel (%p1584) target = $region68
        $region67: #{tpu_custom_call.1} parent=63 // pred_region
          %s1587 = sand.u32 %s143, 1
          %s1588 = scalar_lea.sflag [#allocation4], %s1587
          %s1589 = sand.u32 %s143, 1
          %s1590 = smul.addr %s1589, 512
          %s1591 = scalar_lea.vmem [#allocation10], %s1590
          %1593 = dma.done %s1588, 8192
        $region68: #{tpu_custom_call.1} parent=63 // pred_fallthru
          _
      $region64: #{tpu_custom_call.1} parent=5 // pred_fallthru
        _
    $region6: #{tpu_custom_call.1} parent=1 // loop_footer
      %s23 = sadd.s32 1, %s19
    $region7: #{tpu_custom_call.1} parent=1 // loop_footer_branch
      %18 = sbr.rel target = $region3
    $region8: #{tpu_custom_call.1} parent=1 // loop_exit
      _
    %1594 = vsyncpa [#allocation3], 1
    %s1595 = scalar_lea.sflag [#allocation3], 1
    %1596 = vsyncpa %s1595, 1
    %1597 = vsyncpa [#allocation6], 1
    %1598 = vsyncpa [#allocation9], 1
    %1599 = vsyncpa [#allocation4], 1
    %s1600 = scalar_lea.sflag [#allocation4], 1
    %1601 = vsyncpa %s1600, 1

</llo_original>
